<compile_context>
chip_gen: v6e
topology: v6e:2x2x1
jax: 0.10.0
libtpu: 0.0.40
codegen_flags: <defaults>
</compile_context>

<pallas_src>
import math

import jax
import jax.numpy as jnp
from jax.experimental import pallas as pl
from jax.experimental.pallas import tpu as pltpu


def _round_up(a, b):
    return (a + b - 1) // b * b


def _select_tiles(n, block_m, block_k):
    """Pick (tm, tk) and independent row/col paddings for an n x n adjacency."""
    # Cap tm so the 'parallel' row-stripe axis keeps >=2 stripes (v7x has
    # 2 TensorCores per chip; collapsing to 1 stripe would idle one of them).
    tm_cap = _round_up(-(-n // 2), 8)
    tm = _round_up(max(8, min(block_m, tm_cap)), 8)
    tk = _round_up(max(128, min(block_k, _round_up(n, 128))), 128)
    return tm, tk, _round_up(n, tm), _round_up(n, tk)


def _vmem_budget(tm, tk, fp1, h, c):
    """Actual double-buffered footprint + 25% headroom, clamped to [16, 48] MiB."""
    adj = 2 * tm * tk * 2                    # bf16 adj tile, double buffered
    xk = 2 * tk * (2 * fp1) * 2              # bf16 packed hi/lo RHS
    xi = 2 * tm * fp1 * 4                    # f32 self-term row block
    wts = 2 * (2 * fp1 * h + h * c + c) * 4  # resident weights (double buffered)
    out = 2 * tm * c * 4                     # f32 output stripe
    acc = tm * (2 * fp1) * 4                 # f32 accumulator scratch
    total = int((adj + xk + xi + wts + out + acc) * 1.25)
    return min(max(total, 16 * 1024 * 1024), 48 * 1024 * 1024)


def prepare_adjacency(adj, *, block_m=512, block_k=2048):
    """One-time O(N^2) preprocessing: cast the 0/1 adjacency to bf16 (exact)
    and pad rows/cols independently to the tile grid.  Cache the result and
    reuse it across forward calls -- this full read+write of the N^2 matrix
    would otherwise dominate the kernel's own HBM traffic on every call."""
    n = adj.shape[0]
    _, _, n_pad_m, n_pad_k = _select_tiles(n, block_m, block_k)
    adj_bf16 = adj.astype(jnp.bfloat16)      # exact for a 0/1 adjacency
    if (n_pad_m, n_pad_k) != (n, n):
        adj_bf16 = jnp.pad(adj_bf16, ((0, n_pad_m - n), (0, n_pad_k - n)))
    return adj_bf16


def _sage_kernel(adj_ref, xk_ref, xi_ref, w1x_ref, w1n_ref, w2_ref, b2_ref,
                 out_ref, acc_ref):
    k = pl.program_id(1)

    @pl.when(k == 0)
    def _():
        acc_ref[...] = jnp.zeros_like(acc_ref)

    # Dominant work: one bf16 x bf16 MXU matmul per adj tile (no f32 upcast),
    # f32 accumulate.  The RHS packs [x_hi | 1 , x_lo | 0] so both halves of
    # the hi/lo split share a single LHS (adj) push through the MXU.
    acc_ref[...] += jnp.dot(adj_ref[...], xk_ref[...],
                            preferred_element_type=jnp.float32)

    @pl.when(k == pl.num_programs(1) - 1)
    def _():
        fp1 = xi_ref.shape[1]                     # F + 1
        f = fp1 - 1
        acc = acc_ref[...]                        # [TM, 2*(F+1)]
        s = acc[:, :fp1] + acc[:, fp1:]           # adj @ [x | 1]  (hi + lo halves)
        deg = s[:, f:f + 1] + 1.0                 # adj row-sum + 1
        inv_deg = pl.reciprocal(deg, approx=False)  # exact; once per row stripe
        neigh_ext = s * inv_deg                   # last col junk; zero W1n row kills it

        # concat([x, neigh]) @ W1.T  ==  x_ext @ W1x_pad + neigh_ext @ W1n_pad
        h = (jnp.dot(xi_ref[...], w1x_ref[...], preferred_element_type=jnp.float32)
             + jnp.dot(neigh_ext, w1n_ref[...], preferred_element_type=jnp.float32))
        h = jnp.maximum(h, 0.0)                   # ReLU
        # (dropout: identity in eval mode)

        logits = (jnp.dot(h, w2_ref[...], preferred_element_type=jnp.float32)
                  + b2_ref[...])                  # [TM, C]
        m = jnp.max(logits, axis=1, keepdims=True)
        lse = m + jnp.log(jnp.sum(jnp.exp(logits - m), axis=1, keepdims=True))
        out_ref[...] = (logits - lse).astype(out_ref.dtype)


def sage_classifier_forward(x, adj, w1, w2, b2, *, block_m=512, block_k=2048,
                            prepared_adj=None):
    """
    x   : [N, F]   float32 node features
    adj : [N, N]   float32 dense adjacency (0/1)
    w1  : [H, 2F]  SageConv proj weight (PyTorch Linear layout, no bias)
    w2  : [C, H]   mlp weight
    b2  : [C]      mlp bias
    prepared_adj : optional output of prepare_adjacency(adj, ...) to hoist the
                   O(N^2) cast+pad out of the per-call path.
    returns [N, C] log-probabilities
    """
    N, F = x.shape
    H = w1.shape[0]
    C = w2.shape[0]
    tm, tk, n_pad_m, n_pad_k = _select_tiles(N, block_m, block_k)

    if prepared_adj is None:
        prepared_adj = prepare_adjacency(adj, block_m=block_m, block_k=block_k)
    assert prepared_adj.shape == (n_pad_m, n_pad_k)
    assert prepared_adj.dtype == jnp.bfloat16

    fp1 = F + 1
    # x_ext = [x | 1]: folds the degree row-sum into the adj @ x matmul.
    x_ext = jnp.concatenate(
        [x.astype(jnp.float32), jnp.ones((N, 1), jnp.float32)], axis=-1)
    # bf16 hi/lo split of the reduction RHS so the dominant matmul stays on the
    # native bf16 MXU path while holding ~1e-5 accuracy (f32 accumulate).
    x_hi = x_ext.astype(jnp.bfloat16)
    x_lo = (x_ext - x_hi.astype(jnp.float32)).astype(jnp.bfloat16)
    xk = jnp.concatenate([x_hi, x_lo], axis=-1)            # [N, 2*(F+1)] bf16
    if n_pad_k != N:
        xk = jnp.pad(xk, ((0, n_pad_k - N), (0, 0)))
    xi = x_ext                                              # f32 self-term
    if n_pad_m != N:
        xi = jnp.pad(xi, ((0, n_pad_m - N), (0, 0)))

    # Pre-transpose weights to [in, out]; split W1 into x / neigh halves and
    # pad each with one zero row so they line up with x_ext's ones column.
    w1_t = jnp.transpose(w1).astype(jnp.float32)            # [2F, H]
    zrow = jnp.zeros((1, H), jnp.float32)
    w1x_pad = jnp.concatenate([w1_t[:F], zrow], axis=0)     # [F+1, H]
    w1n_pad = jnp.concatenate([w1_t[F:], zrow], axis=0)     # [F+1, H]
    w2_t = jnp.transpose(w2).astype(jnp.float32)            # [H, C]
    b2_2d = b2.reshape(1, C).astype(jnp.float32)            # 2D for TPU layout

    grid = (n_pad_m // tm, n_pad_k // tk)

    out = pl.pallas_call(
        _sage_kernel,
        out_shape=jax.ShapeDtypeStruct((n_pad_m, C), jnp.float32),
        grid_spec=pltpu.PrefetchScalarGridSpec(
            num_scalar_prefetch=0,
            grid=grid,
            in_specs=[
                pl.BlockSpec((tm, tk), lambda i, k: (i, k)),        # adj tile (bf16)
                pl.BlockSpec((tk, 2 * fp1), lambda i, k: (k, 0)),   # [x_hi|1, x_lo|0] bf16
                pl.BlockSpec((tm, fp1), lambda i, k: (i, 0)),       # x_ext f32 (self term)
                pl.BlockSpec((fp1, H), lambda i, k: (0, 0)),        # W1 x-half, resident
                pl.BlockSpec((fp1, H), lambda i, k: (0, 0)),        # W1 neigh-half, resident
                pl.BlockSpec((H, C), lambda i, k: (0, 0)),          # W2, resident
                pl.BlockSpec((1, C), lambda i, k: (0, 0)),          # b2, resident
            ],
            out_specs=pl.BlockSpec((tm, C), lambda i, k: (i, 0)),
            scratch_shapes=[pltpu.VMEM((tm, 2 * fp1), jnp.float32)],
        ),
        compiler_params=pltpu.CompilerParams(
            dimension_semantics=("parallel", "arbitrary"),
            vmem_limit_bytes=_vmem_budget(tm, tk, fp1, H, C),
        ),
    )(prepared_adj, xk, xi, w1x_pad, w1n_pad, w2_t, b2_2d)

    return out[:N]


if __name__ == "__main__":
    # Small shapes consistent with the module: N nodes, nembed, nhid, nclass.
    # N=200 with 128x128 requested tiles exercises independent row/col padding
    # (n_pad_m=208, n_pad_k=256), the 2-stripe parallel axis and the cross-k
    # accumulation path (grid = (2, 2)).
    N, nembed, nhid, nclass = 200, 32, 32, 8

    key = jax.random.PRNGKey(0)
    kx, ka, kw1, kw2, kb2 = jax.random.split(key, 5)

    x = jax.random.normal(kx, (N, nembed), dtype=jnp.float32)
    # Symmetric binary adjacency.
    adj_raw = (jax.random.uniform(ka, (N, N)) < 0.3).astype(jnp.float32)
    adj = jnp.maximum(adj_raw, adj_raw.T)

    # Parameter init matching the module's __init__ shapes:
    #   SageConv.proj.weight ~ N(0,1), shape [nhid, 2*nembed], no bias
    #   mlp.weight ~ N(0,0.05), shape [nclass, nhid]; mlp.bias default init
    w1 = jax.random.normal(kw1, (nhid, 2 * nembed), dtype=jnp.float32)
    w2 = 0.05 * jax.random.normal(kw2, (nclass, nhid), dtype=jnp.float32)
    bound = 1.0 / math.sqrt(nhid)
    b2 = jax.random.uniform(kb2, (nclass,), minval=-bound, maxval=bound,
                            dtype=jnp.float32)

    # Small demo tiles (production defaults are block_m=512, block_k=2048).
    block_m, block_k = 128, 128
    # Hoist the O(N^2) adjacency preprocessing out of the per-call path.
    adj_prepared = prepare_adjacency(adj, block_m=block_m, block_k=block_k)

    out = sage_classifier_forward(x, adj, w1, w2, b2,
                                  block_m=block_m, block_k=block_k,
                                  prepared_adj=adj_prepared)
    jax.block_until_ready(out)

    # Pure-JAX reference of the same math (highest-precision matmuls).
    hp = jax.lax.Precision.HIGHEST
    deg = jnp.sum(adj, axis=1, keepdims=True) + 1.0
    neigh = jnp.dot(adj, x, precision=hp) / deg
    h = jnp.maximum(
        jnp.dot(jnp.concatenate([x, neigh], axis=-1), w1.T, precision=hp), 0.0)
    ref = jax.nn.log_softmax(jnp.dot(h, w2.T, precision=hp) + b2, axis=1)

    assert out.shape == (N, nclass)
    assert jnp.allclose(out, ref, atol=1e-4, rtol=1e-4), "mismatch vs reference"

    print("KERNEL_OK")
</pallas_src>

<mosaic_0001>
module attributes {stable_mosaic.version = 11 : i64} {
  func.func @_sage_kernel(%arg0: i32, %arg1: i32, %arg2: memref<104x128xbf16, #tpu.memory_space<vmem>>, %arg3: memref<128x66xbf16, #tpu.memory_space<vmem>>, %arg4: memref<104x33xf32, #tpu.memory_space<vmem>>, %arg5: memref<33x32xf32, #tpu.memory_space<vmem>>, %arg6: memref<33x32xf32, #tpu.memory_space<vmem>>, %arg7: memref<32x8xf32, #tpu.memory_space<vmem>>, %arg8: memref<1x8xf32, #tpu.memory_space<vmem>>, %arg9: memref<104x8xf32, #tpu.memory_space<vmem>>, %arg10: memref<104x66xf32, #tpu.memory_space<vmem>>) attributes {dimension_semantics = [#tpu.dimension_semantics<parallel>, #tpu.dimension_semantics<arbitrary>], iteration_bounds = array<i64: 2, 2>, scalar_prefetch = 0 : i64, scratch_operands = 1 : i64, tpu.core_type = #tpu.core_type<tc>, window_params = [{transform_indices = @transform_0, window_bounds = array<i64: 104, 128>}, {transform_indices = @transform_1, window_bounds = array<i64: 128, 66>}, {transform_indices = @transform_2, window_bounds = array<i64: 104, 33>}, {pipeline_mode = #tpu.pipeline_mode<synchronous>, transform_indices = @transform_3, window_bounds = array<i64: 33, 32>}, {pipeline_mode = #tpu.pipeline_mode<synchronous>, transform_indices = @transform_4, window_bounds = array<i64: 33, 32>}, {pipeline_mode = #tpu.pipeline_mode<synchronous>, transform_indices = @transform_5, window_bounds = array<i64: 32, 8>}, {pipeline_mode = #tpu.pipeline_mode<synchronous>, transform_indices = @transform_6, window_bounds = array<i64: 1, 8>}, {transform_indices = @transform_7, window_bounds = array<i64: 104, 8>}]} {
    %c0_i32 = arith.constant 0 : i32
    %0 = arith.cmpi eq, %arg1, %c0_i32 : i32
    %1 = arith.extui %0 : i1 to i32
    %c0_i32_0 = arith.constant 0 : i32
    %2 = arith.cmpi ne, %1, %c0_i32_0 : i32
    scf.if %2 {
      %cst_9 = arith.constant 0.000000e+00 : f32
      %12 = vector.broadcast %cst_9 : f32 to vector<104x66xf32>
      %c0_10 = arith.constant 0 : index
      %c0_11 = arith.constant 0 : index
      %13 = vector.load %arg10[%c0_10, %c0_11] : memref<104x66xf32, #tpu.memory_space<vmem>>, vector<104x66xf32>
      tpu.vector_store %arg10[%c0_10, %c0_11], %12 {strides = array<i32>} : memref<104x66xf32, #tpu.memory_space<vmem>>, vector<104x66xf32>,
    } else {
    }
    %c0 = arith.constant 0 : index
    %c0_1 = arith.constant 0 : index
    %3 = vector.load %arg10[%c0, %c0_1] : memref<104x66xf32, #tpu.memory_space<vmem>>, vector<104x66xf32>
    %c0_2 = arith.constant 0 : index
    %c0_3 = arith.constant 0 : index
    %4 = vector.load %arg2[%c0_2, %c0_3] : memref<104x128xbf16, #tpu.memory_space<vmem>>, vector<104x128xbf16>
    %c0_4 = arith.constant 0 : index
    %c0_5 = arith.constant 0 : index
    %5 = vector.load %arg3[%c0_4, %c0_5] : memref<128x66xbf16, #tpu.memory_space<vmem>>, vector<128x66xbf16>
    %cst = arith.constant dense<0.000000e+00> : vector<104x66xf32>
    %6 = tpu.matmul %4, %5, %cst {dimension_numbers = #tpu.dot_dimension_numbers<[1], [0], [0], [1], [0, 0, 1, 1], [], []>} : vector<104x128xbf16>, vector<128x66xbf16>, vector<104x66xf32> -> vector<104x66xf32>
    %7 = arith.addf %3, %6 : vector<104x66xf32>
    %c0_6 = arith.constant 0 : index
    %c0_7 = arith.constant 0 : index
    %8 = vector.load %arg10[%c0_6, %c0_7] : memref<104x66xf32, #tpu.memory_space<vmem>>, vector<104x66xf32>
    tpu.vector_store %arg10[%c0_6, %c0_7], %7 {strides = array<i32>} : memref<104x66xf32, #tpu.memory_space<vmem>>, vector<104x66xf32>,
    %c1_i32 = arith.constant 1 : i32
    %9 = arith.cmpi eq, %arg1, %c1_i32 : i32
    %10 = arith.extui %9 : i1 to i32
    %c0_i32_8 = arith.constant 0 : i32
    %11 = arith.cmpi ne, %10, %c0_i32_8 : i32
    scf.if %11 {
      %c0_9 = arith.constant 0 : index
      %c0_10 = arith.constant 0 : index
      %12 = vector.load %arg10[%c0_9, %c0_10] : memref<104x66xf32, #tpu.memory_space<vmem>>, vector<104x66xf32>
      %13 = vector.extract_strided_slice %12 {offsets = [0, 0], sizes = [104, 33], strides = [1, 1]} : vector<104x66xf32> to vector<104x33xf32>
      %14 = vector.extract_strided_slice %12 {offsets = [0, 33], sizes = [104, 33], strides = [1, 1]} : vector<104x66xf32> to vector<104x33xf32>
      %15 = arith.addf %13, %14 : vector<104x33xf32>
      %16 = vector.extract_strided_slice %15 {offsets = [0, 32], sizes = [104, 1], strides = [1, 1]} : vector<104x33xf32> to vector<104x1xf32>
      %cst_11 = arith.constant 1.000000e+00 : f32
      %17 = vector.broadcast %cst_11 : f32 to vector<104x1xf32>
      %18 = arith.addf %16, %17 : vector<104x1xf32>
      %19 = tpu.reciprocal %18 : vector<104x1xf32> -> vector<104x1xf32>
      %20 = vector.broadcast %19 : vector<104x1xf32> to vector<104x33xf32>
      %21 = arith.mulf %15, %20 : vector<104x33xf32>
      %c0_12 = arith.constant 0 : index
      %c0_13 = arith.constant 0 : index
      %22 = vector.load %arg4[%c0_12, %c0_13] : memref<104x33xf32, #tpu.memory_space<vmem>>, vector<104x33xf32>
      %c0_14 = arith.constant 0 : index
      %c0_15 = arith.constant 0 : index
      %23 = vector.load %arg5[%c0_14, %c0_15] : memref<33x32xf32, #tpu.memory_space<vmem>>, vector<33x32xf32>
      %cst_16 = arith.constant dense<0.000000e+00> : vector<104x32xf32>
      %24 = tpu.matmul %22, %23, %cst_16 {dimension_numbers = #tpu.dot_dimension_numbers<[1], [0], [0], [1], [0, 0, 1, 1], [], []>} : vector<104x33xf32>, vector<33x32xf32>, vector<104x32xf32> -> vector<104x32xf32>
      %c0_17 = arith.constant 0 : index
      %c0_18 = arith.constant 0 : index
      %25 = vector.load %arg6[%c0_17, %c0_18] : memref<33x32xf32, #tpu.memory_space<vmem>>, vector<33x32xf32>
      %cst_19 = arith.constant dense<0.000000e+00> : vector<104x32xf32>
      %26 = tpu.matmul %21, %25, %cst_19 {dimension_numbers = #tpu.dot_dimension_numbers<[1], [0], [0], [1], [0, 0, 1, 1], [], []>} : vector<104x33xf32>, vector<33x32xf32>, vector<104x32xf32> -> vector<104x32xf32>
      %27 = arith.addf %24, %26 : vector<104x32xf32>
      %cst_20 = arith.constant 0.000000e+00 : f32
      %28 = vector.broadcast %cst_20 : f32 to vector<104x32xf32>
      %29 = arith.maximumf %27, %28 : vector<104x32xf32>
      %c0_21 = arith.constant 0 : index
      %c0_22 = arith.constant 0 : index
      %30 = vector.load %arg7[%c0_21, %c0_22] : memref<32x8xf32, #tpu.memory_space<vmem>>, vector<32x8xf32>
      %cst_23 = arith.constant dense<0.000000e+00> : vector<104x8xf32>
      %31 = tpu.matmul %29, %30, %cst_23 {dimension_numbers = #tpu.dot_dimension_numbers<[1], [0], [0], [1], [0, 0, 1, 1], [], []>} : vector<104x32xf32>, vector<32x8xf32>, vector<104x8xf32> -> vector<104x8xf32>
      %c0_24 = arith.constant 0 : index
      %c0_25 = arith.constant 0 : index
      %32 = vector.load %arg8[%c0_24, %c0_25] : memref<1x8xf32, #tpu.memory_space<vmem>>, vector<1x8xf32>
      %33 = vector.broadcast %32 : vector<1x8xf32> to vector<104x8xf32>
      %34 = arith.addf %31, %33 : vector<104x8xf32>
      %cst_26 = arith.constant dense<0xFF800000> : vector<104xf32>
      %35 = vector.multi_reduction <maximumf>, %34, %cst_26 [1] : vector<104x8xf32> to vector<104xf32>
      %36 = vector.shape_cast %35 : vector<104xf32> to vector<104x1xf32>
      %37 = vector.broadcast %36 : vector<104x1xf32> to vector<104x8xf32>
      %38 = arith.subf %34, %37 : vector<104x8xf32>
      %39 = math.exp %38 : vector<104x8xf32>
      %cst_27 = arith.constant dense<0.000000e+00> : vector<104xf32>
      %40 = vector.multi_reduction <add>, %39, %cst_27 [1] : vector<104x8xf32> to vector<104xf32>
      %41 = vector.shape_cast %40 : vector<104xf32> to vector<104x1xf32>
      %42 = math.log %41 : vector<104x1xf32>
      %43 = arith.addf %36, %42 : vector<104x1xf32>
      %44 = vector.broadcast %43 : vector<104x1xf32> to vector<104x8xf32>
      %45 = arith.subf %34, %44 : vector<104x8xf32>
      %c0_28 = arith.constant 0 : index
      %c0_29 = arith.constant 0 : index
      %46 = vector.load %arg9[%c0_28, %c0_29] : memref<104x8xf32, #tpu.memory_space<vmem>>, vector<104x8xf32>
      tpu.vector_store %arg9[%c0_28, %c0_29], %45 {strides = array<i32>} : memref<104x8xf32, #tpu.memory_space<vmem>>, vector<104x8xf32>,
    } else {
    }
    return
  }
  func.func @transform_0(%arg0: i32, %arg1: i32) -> (i32, i32) {
    %c0_i32 = arith.constant 0 : i32
    return %arg0, %arg1 : i32, i32
  }
  func.func @transform_1(%arg0: i32, %arg1: i32) -> (i32, i32) {
    %c0_i32 = arith.constant 0 : i32
    %c0_i32_0 = arith.constant 0 : i32
    return %arg1, %c0_i32 : i32, i32
  }
  func.func @transform_2(%arg0: i32, %arg1: i32) -> (i32, i32) {
    %c0_i32 = arith.constant 0 : i32
    %c0_i32_0 = arith.constant 0 : i32
    return %arg0, %c0_i32 : i32, i32
  }
  func.func @transform_3(%arg0: i32, %arg1: i32) -> (i32, i32) {
    %c0_i32 = arith.constant 0 : i32
    %c0_i32_0 = arith.constant 0 : i32
    %c0_i32_1 = arith.constant 0 : i32
    return %c0_i32, %c0_i32_0 : i32, i32
  }
  func.func @transform_4(%arg0: i32, %arg1: i32) -> (i32, i32) {
    %c0_i32 = arith.constant 0 : i32
    %c0_i32_0 = arith.constant 0 : i32
    %c0_i32_1 = arith.constant 0 : i32
    return %c0_i32, %c0_i32_0 : i32, i32
  }
  func.func @transform_5(%arg0: i32, %arg1: i32) -> (i32, i32) {
    %c0_i32 = arith.constant 0 : i32
    %c0_i32_0 = arith.constant 0 : i32
    %c0_i32_1 = arith.constant 0 : i32
    return %c0_i32, %c0_i32_0 : i32, i32
  }
  func.func @transform_6(%arg0: i32, %arg1: i32) -> (i32, i32) {
    %c0_i32 = arith.constant 0 : i32
    %c0_i32_0 = arith.constant 0 : i32
    %c0_i32_1 = arith.constant 0 : i32
    return %c0_i32, %c0_i32_0 : i32, i32
  }
  func.func @transform_7(%arg0: i32, %arg1: i32) -> (i32, i32) {
    %c0_i32 = arith.constant 0 : i32
    %c0_i32_0 = arith.constant 0 : i32
    return %arg0, %c0_i32 : i32, i32
  }
}

</mosaic_0001>

<llo_original>
// kernel: tpu_custom_call.1
$region0: #{tpu_custom_call.1}
  #allocation0 [shape = 'u32[]', space=smem, size = 0x4, offset = 0x4, fixed_abs, tag = 'smem constant byte address 0x4 - core index']
  #allocation1 [shape = 'u32[144,128]{1,0:T(1,128)}', space=vmem, size = 0x12000, scoped, tag = 'internal scratch']
  #allocation2 [shape = 'f32[104,66]{1,0:T(8,128)}', space=vmem, size = 0xd000, scoped, tag = 'scratch operand']
  %s0 = inlined_call_operand.vmem [shape: bf16[208,256], index: 0, kind: input, shape index: {}]
  %s1 = inlined_call_operand.vmem [shape: bf16[256,66], index: 1, kind: input, shape index: {}]
  %s2 = inlined_call_operand.vmem [shape: f32[208,33], index: 2, kind: input, shape index: {}]
  %s3 = inlined_call_operand.vmem [shape: f32[33,32], index: 3, kind: input, shape index: {}]
  %s4 = inlined_call_operand.vmem [shape: f32[33,32], index: 4, kind: input, shape index: {}]
  %s5 = inlined_call_operand.vmem [shape: f32[32,8], index: 5, kind: input, shape index: {}]
  %s6 = inlined_call_operand.vmem [shape: f32[1,8], index: 6, kind: input, shape index: {}]
  %s7 = inlined_call_operand.vmem [shape: f32[208,8], index: 7, kind: output, shape index: {}]
  %s8 = sld [smem:[#allocation0]]
  $region110: #{tpu_custom_call.1} parent=0
    _
  %s10 = ssub.s32 1, %s8
  %s11 = scalar_select 0, %s10, %s8
  $region1: #{tpu_custom_call.1} parent=0
    #allocation3 [shape = 'u8[53248]{0}', space=vmem, size = 0xd000, scoped, tag = 'input window, operand 0']
    loop: start=0, step=1, limit=6
    $region2: #{tpu_custom_call.1} parent=1 // loop_pre_header
      _
    $region3: #{tpu_custom_call.1} parent=1 // loop_header
      %s13 = sphi 0, %s17
      %p14 = scmp.ge.s32.totalorder %s13, 6
      %s20 = sphi 0, %s32
      %s21 = sphi 0, %s28
      %s22 = sphi 0, %s20
      %s23 = sphi 0, %s21
      %s24 = sphi 0, %s22
      %s25 = sphi 0, %s23
      %s37 = sphi 0, %s39
      %s40 = sphi 0, %s37
      %s41 = sphi 0, %s40
      %s57 = sphi 0, %s41
      %s63 = sphi 0, %s65
      %s66 = sphi 0, %s63
      %s67 = sphi 0, %s66
      %s83 = sphi 0, %s67
      %s89 = sphi 0, %s91
      %s92 = sphi 0, %s89
      %s93 = sphi 0, %s92
      %s109 = sphi 0, %s93
      %s113 = sphi 0, %s113
      %s115 = sphi 0, %s113
      %s116 = sphi 0, %s115
      %s130 = sphi 0, %s116
      %s134 = sphi 0, %s134
      %s136 = sphi 0, %s134
      %s137 = sphi 0, %s136
      %s151 = sphi 0, %s137
      %s155 = sphi 0, %s155
      %s157 = sphi 0, %s155
      %s158 = sphi 0, %s157
      %s172 = sphi 0, %s158
      %s176 = sphi 0, %s176
      %s178 = sphi 0, %s176
      %s179 = sphi 0, %s178
      %s193 = sphi 0, %s179
      %s199 = sphi 0, %s201
      %s202 = sphi 0, %s199
      %s203 = sphi 0, %s202
      %s219 = sphi 0, %s203
    $region4: #{tpu_custom_call.1} parent=1 // loop_header_branch
      %16 = sbr.rel (%p14) target = $region8
    $region5: #{tpu_custom_call.1} parent=1 // loop_body
      %s18 = ssub.s32 %s13, 1
      %s19 = ssub.s32 %s13, 2
      %s26 = sadd.s32 1, %s21
      %p27 = scmp.ge.s32.totalorder %s26, 2
      %s28 = scalar_select %p27, 0, %s26
      %s29 = sadd.s32 1, %s20
      %s30 = scalar_select %p27, %s29, %s20
      %p31 = scmp.ge.s32.totalorder %s30, 2
      %s32 = scalar_select %p31, 0, %s30
      %s33 = ssub.s32 %s20, %s32
      %s34 = ssub.s32 %s21, %s28
      %s35 = sor.u32 %s33, %s34
      %p36 = scmp.eq.s32.totalorder %s35, 0
      %s38 = sadd.s32 %s37, 1
      %s39 = scalar_select %p36, %s37, %s38
      %p42 = pneg %p36
      %p43 = scmp.eq.s32.totalorder %s13, 3
      %p44 = por %p42, %p43
      %p45 = scmp.ne.s32.totalorder %s37, %s40
      %p46 = scmp.eq.s32.totalorder %s13, 0
      %p47 = por %p45, %p46
      %p48 = scmp.ne.s32.totalorder %s37, %s40
      %p49 = scmp.eq.s32.totalorder %s18, 3
      %p50 = por %p48, %p49
      %p51 = scmp.ne.s32.totalorder %s40, %s41
      %p52 = scmp.eq.s32.totalorder %s18, 0
      %p53 = por %p51, %p52
      %p54 = scmp.ne.s32.totalorder %s40, %s41
      %p55 = scmp.eq.s32.totalorder %s19, 3
      %p56 = por %p54, %p55
      %p58 = scmp.ne.s32.totalorder %s41, %s57
      %p59 = scmp.eq.s32.totalorder %s19, 0
      %p60 = por %p58, %p59
      %s61 = ssub.s32 %s21, %s28
      %p62 = scmp.eq.s32.totalorder %s61, 0
      %s64 = sadd.s32 %s63, 1
      %s65 = scalar_select %p62, %s63, %s64
      %p68 = pneg %p62
      %p69 = scmp.eq.s32.totalorder %s13, 3
      %p70 = por %p68, %p69
      %p71 = scmp.ne.s32.totalorder %s63, %s66
      %p72 = scmp.eq.s32.totalorder %s13, 0
      %p73 = por %p71, %p72
      %p74 = scmp.ne.s32.totalorder %s63, %s66
      %p75 = scmp.eq.s32.totalorder %s18, 3
      %p76 = por %p74, %p75
      %p77 = scmp.ne.s32.totalorder %s66, %s67
      %p78 = scmp.eq.s32.totalorder %s18, 0
      %p79 = por %p77, %p78
      %p80 = scmp.ne.s32.totalorder %s66, %s67
      %p81 = scmp.eq.s32.totalorder %s19, 3
      %p82 = por %p80, %p81
      %p84 = scmp.ne.s32.totalorder %s67, %s83
      %p85 = scmp.eq.s32.totalorder %s19, 0
      %p86 = por %p84, %p85
      %s87 = ssub.s32 %s20, %s32
      %p88 = scmp.eq.s32.totalorder %s87, 0
      %s90 = sadd.s32 %s89, 1
      %s91 = scalar_select %p88, %s89, %s90
      %p94 = pneg %p88
      %p95 = scmp.eq.s32.totalorder %s13, 3
      %p96 = por %p94, %p95
      %p97 = scmp.ne.s32.totalorder %s89, %s92
      %p98 = scmp.eq.s32.totalorder %s13, 0
      %p99 = por %p97, %p98
      %p100 = scmp.ne.s32.totalorder %s89, %s92
      %p101 = scmp.eq.s32.totalorder %s18, 3
      %p102 = por %p100, %p101
      %p103 = scmp.ne.s32.totalorder %s92, %s93
      %p104 = scmp.eq.s32.totalorder %s18, 0
      %p105 = por %p103, %p104
      %p106 = scmp.ne.s32.totalorder %s92, %s93
      %p107 = scmp.eq.s32.totalorder %s19, 3
      %p108 = por %p106, %p107
      %p110 = scmp.ne.s32.totalorder %s93, %s109
      %p111 = scmp.eq.s32.totalorder %s19, 0
      %p112 = por %p110, %p111
      %s114 = sadd.s32 %s113, 1
      %p117 = scmp.eq.s32.totalorder %s13, 3
      %p118 = scmp.ne.s32.totalorder %s113, %s115
      %p119 = scmp.eq.s32.totalorder %s13, 0
      %p120 = por %p118, %p119
      %p121 = scmp.ne.s32.totalorder %s113, %s115
      %p122 = scmp.eq.s32.totalorder %s18, 3
      %p123 = por %p121, %p122
      %p124 = scmp.ne.s32.totalorder %s115, %s116
      %p125 = scmp.eq.s32.totalorder %s18, 0
      %p126 = por %p124, %p125
      %p127 = scmp.ne.s32.totalorder %s115, %s116
      %p128 = scmp.eq.s32.totalorder %s19, 3
      %p129 = por %p127, %p128
      %p131 = scmp.ne.s32.totalorder %s116, %s130
      %p132 = scmp.eq.s32.totalorder %s19, 0
      %p133 = por %p131, %p132
      %s135 = sadd.s32 %s134, 1
      %p138 = scmp.eq.s32.totalorder %s13, 3
      %p139 = scmp.ne.s32.totalorder %s134, %s136
      %p140 = scmp.eq.s32.totalorder %s13, 0
      %p141 = por %p139, %p140
      %p142 = scmp.ne.s32.totalorder %s134, %s136
      %p143 = scmp.eq.s32.totalorder %s18, 3
      %p144 = por %p142, %p143
      %p145 = scmp.ne.s32.totalorder %s136, %s137
      %p146 = scmp.eq.s32.totalorder %s18, 0
      %p147 = por %p145, %p146
      %p148 = scmp.ne.s32.totalorder %s136, %s137
      %p149 = scmp.eq.s32.totalorder %s19, 3
      %p150 = por %p148, %p149
      %p152 = scmp.ne.s32.totalorder %s137, %s151
      %p153 = scmp.eq.s32.totalorder %s19, 0
      %p154 = por %p152, %p153
      %s156 = sadd.s32 %s155, 1
      %p159 = scmp.eq.s32.totalorder %s13, 3
      %p160 = scmp.ne.s32.totalorder %s155, %s157
      %p161 = scmp.eq.s32.totalorder %s13, 0
      %p162 = por %p160, %p161
      %p163 = scmp.ne.s32.totalorder %s155, %s157
      %p164 = scmp.eq.s32.totalorder %s18, 3
      %p165 = por %p163, %p164
      %p166 = scmp.ne.s32.totalorder %s157, %s158
      %p167 = scmp.eq.s32.totalorder %s18, 0
      %p168 = por %p166, %p167
      %p169 = scmp.ne.s32.totalorder %s157, %s158
      %p170 = scmp.eq.s32.totalorder %s19, 3
      %p171 = por %p169, %p170
      %p173 = scmp.ne.s32.totalorder %s158, %s172
      %p174 = scmp.eq.s32.totalorder %s19, 0
      %p175 = por %p173, %p174
      %s177 = sadd.s32 %s176, 1
      %p180 = scmp.eq.s32.totalorder %s13, 3
      %p181 = scmp.ne.s32.totalorder %s176, %s178
      %p182 = scmp.eq.s32.totalorder %s13, 0
      %p183 = por %p181, %p182
      %p184 = scmp.ne.s32.totalorder %s176, %s178
      %p185 = scmp.eq.s32.totalorder %s18, 3
      %p186 = por %p184, %p185
      %p187 = scmp.ne.s32.totalorder %s178, %s179
      %p188 = scmp.eq.s32.totalorder %s18, 0
      %p189 = por %p187, %p188
      %p190 = scmp.ne.s32.totalorder %s178, %s179
      %p191 = scmp.eq.s32.totalorder %s19, 3
      %p192 = por %p190, %p191
      %p194 = scmp.ne.s32.totalorder %s179, %s193
      %p195 = scmp.eq.s32.totalorder %s19, 0
      %p196 = por %p194, %p195
      %s197 = ssub.s32 %s20, %s32
      %p198 = scmp.eq.s32.totalorder %s197, 0
      %s200 = sadd.s32 %s199, 1
      %s201 = scalar_select %p198, %s199, %s200
      %p204 = pneg %p198
      %p205 = scmp.eq.s32.totalorder %s13, 3
      %p206 = por %p204, %p205
      %p207 = scmp.ne.s32.totalorder %s199, %s202
      %p208 = scmp.eq.s32.totalorder %s13, 0
      %p209 = por %p207, %p208
      %p210 = scmp.ne.s32.totalorder %s199, %s202
      %p211 = scmp.eq.s32.totalorder %s18, 3
      %p212 = por %p210, %p211
      %p213 = scmp.ne.s32.totalorder %s202, %s203
      %p214 = scmp.eq.s32.totalorder %s18, 0
      %p215 = por %p213, %p214
      %p216 = scmp.ne.s32.totalorder %s202, %s203
      %p217 = scmp.eq.s32.totalorder %s19, 3
      %p218 = por %p216, %p217
      %p220 = scmp.ne.s32.totalorder %s203, %s219
      %p221 = scmp.eq.s32.totalorder %s19, 0
      %p222 = por %p220, %p221
      %p223 = scmp.le.s32.totalorder 1, %s13
      %p224 = scmp.lt.s32.totalorder %s13, 5
      %p225 = pnand %p223, %p224
      %p226 = pneg %p225
      // Predicated region
      $region9: #{tpu_custom_call.1} parent=5 // pred_check
        _
      $region10: #{tpu_custom_call.1} parent=5 // pred_check_branch
        %228 = sbr.rel (%p225) target = $region12
      $region11: #{tpu_custom_call.1} parent=5 // pred_region
        %s229 = ssub.s32 %s13, 1
        // Predicated region
        $region13: #{tpu_custom_call.1} parent=11 // pred_check
          %p230 = pneg %p126
        $region14: #{tpu_custom_call.1} parent=11 // pred_check_branch
          %232 = sbr.rel (%p230) target = $region16
        $region15: #{tpu_custom_call.1} parent=11 // pred_region
          _
        $region16: #{tpu_custom_call.1} parent=11 // pred_fallthru
          _
        // Predicated region
        $region17: #{tpu_custom_call.1} parent=11 // pred_check
          %p233 = pneg %p147
        $region18: #{tpu_custom_call.1} parent=11 // pred_check_branch
          %235 = sbr.rel (%p233) target = $region20
        $region19: #{tpu_custom_call.1} parent=11 // pred_region
          _
        $region20: #{tpu_custom_call.1} parent=11 // pred_fallthru
          _
        // Predicated region
        $region21: #{tpu_custom_call.1} parent=11 // pred_check
          %p236 = pneg %p168
        $region22: #{tpu_custom_call.1} parent=11 // pred_check_branch
          %238 = sbr.rel (%p236) target = $region24
        $region23: #{tpu_custom_call.1} parent=11 // pred_region
          _
        $region24: #{tpu_custom_call.1} parent=11 // pred_fallthru
          _
        // Predicated region
        $region25: #{tpu_custom_call.1} parent=11 // pred_check
          %p239 = pneg %p189
        $region26: #{tpu_custom_call.1} parent=11 // pred_check_branch
          %241 = sbr.rel (%p239) target = $region28
        $region27: #{tpu_custom_call.1} parent=11 // pred_region
          _
        $region28: #{tpu_custom_call.1} parent=11 // pred_fallthru
          _
      $region12: #{tpu_custom_call.1} parent=5 // pred_fallthru
        _
      %p242 = scmp.lt.s32.totalorder %s13, 4
      // Predicated region
      $region29: #{tpu_custom_call.1} parent=5 // pred_check
        %p243 = pneg %p242
      $region30: #{tpu_custom_call.1} parent=5 // pred_check_branch
        %245 = sbr.rel (%p243) target = $region32
      $region31: #{tpu_custom_call.1} parent=5 // pred_region
        // Predicated region
        $region33: #{tpu_custom_call.1} parent=31 // pred_check
          %p246 = pneg %p47
        $region34: #{tpu_custom_call.1} parent=31 // pred_check_branch
          %248 = sbr.rel (%p246) target = $region36
        $region35: #{tpu_custom_call.1} parent=31 // pred_region
          %s249 = sand.u32 %s37, 1
          %s250 = sand.u32 %s37, 1
          %s251 = smul.addr %s250, 52
          %s252 = scalar_lea.vmem [#allocation3], %s251
          %s253 = smul.u32 13, %s20
          %s254 = smul.addr %s253, 2
          %s255 = sadd.s32 %s21, %s254
          %s256 = smul.addr %s255, 4
          %s257 = scalar_lea.vmem %s0, %s256
          // Predicated region
          $region37: #{tpu_custom_call.1} parent=35 // pred_check
            _
          $region38: #{tpu_custom_call.1} parent=35 // pred_check_branch
            %259 = sbr.rel (0) target = $region40
          $region39: #{tpu_custom_call.1} parent=35 // pred_region
            // Predicated region
            $region41: #{tpu_custom_call.1} parent=39 // pred_check
              _
            $region42: #{tpu_custom_call.1} parent=39 // pred_check_branch
              %261 = sbr.rel target = $region44
            $region43: #{tpu_custom_call.1} parent=39 // pred_region
              // Predicated region
              $region56: #{tpu_custom_call.1} parent=43 // pred_check
                _
              $region57: #{tpu_custom_call.1} parent=43 // pred_check_branch
                %301 = sbr.rel (0) target = $region59
              $region58: #{tpu_custom_call.1} parent=43 // pred_region
                loop: start=0, step=1, limit=1
                $region60: #{tpu_custom_call.1} parent=58 // loop_pre_header
                  _
                $region61: #{tpu_custom_call.1} parent=58 // loop_header
                  %s303 = sphi 0, %s307
                  %p304 = scmp.ge.s32.totalorder %s303, 1
                  %s308 = sphi %s257, %s257
                  %s309 = sphi %s252, %s252
                $region62: #{tpu_custom_call.1} parent=58 // loop_header_branch
                  %306 = sbr.rel (%p304) target = $region66
                $region63: #{tpu_custom_call.1} parent=58 // loop_body
                  _
                $region64: #{tpu_custom_call.1} parent=58 // loop_footer
                  %s307 = sadd.s32 1, %s303
                $region65: #{tpu_custom_call.1} parent=58 // loop_footer_branch
                  %302 = sbr.rel target = $region61
                $region66: #{tpu_custom_call.1} parent=58 // loop_exit
                  _
                %s311 = ssub.s32 16, 1
                loop: start=0, step=1, limit=1
                $region67: #{tpu_custom_call.1} parent=58 // loop_pre_header
                  _
                $region68: #{tpu_custom_call.1} parent=58 // loop_header
                  %s313 = sphi 0, %s317
                  %p314 = scmp.ge.s32.totalorder %s313, 1
                  %s318 = sphi %s257, %s257
                  %s319 = sphi %s252, %s252
                $region69: #{tpu_custom_call.1} parent=58 // loop_header_branch
                  %316 = sbr.rel (%p314) target = $region73
                $region70: #{tpu_custom_call.1} parent=58 // loop_body
                  %v320 = vld [vmem:[%s318] sm:%s311]
                  %321 = vst [vmem:[%s319] sm:%s311] %v320
                  %v322 = vld [vmem:[%s318 + $0x8] sm:%s311]
                  %323 = vst [vmem:[%s319 + $0x4] sm:%s311] %v322
                  %v324 = vld [vmem:[%s318 + $0x10] sm:%s311]
                  %325 = vst [vmem:[%s319 + $0x8] sm:%s311] %v324
                  %v326 = vld [vmem:[%s318 + $0x18] sm:%s311]
                  %327 = vst [vmem:[%s319 + $0xc] sm:%s311] %v326
                  %v328 = vld [vmem:[%s318 + $0x20] sm:%s311]
                  %329 = vst [vmem:[%s319 + $0x10] sm:%s311] %v328
                  %v330 = vld [vmem:[%s318 + $0x28] sm:%s311]
                  %331 = vst [vmem:[%s319 + $0x14] sm:%s311] %v330
                  %v332 = vld [vmem:[%s318 + $0x30] sm:%s311]
                  %333 = vst [vmem:[%s319 + $0x18] sm:%s311] %v332
                  %v334 = vld [vmem:[%s318 + $0x38] sm:%s311]
                  %335 = vst [vmem:[%s319 + $0x1c] sm:%s311] %v334
                  %v336 = vld [vmem:[%s318 + $0x40] sm:%s311]
                  %337 = vst [vmem:[%s319 + $0x20] sm:%s311] %v336
                  %v338 = vld [vmem:[%s318 + $0x48] sm:%s311]
                  %339 = vst [vmem:[%s319 + $0x24] sm:%s311] %v338
                  %v340 = vld [vmem:[%s318 + $0x50] sm:%s311]
                  %341 = vst [vmem:[%s319 + $0x28] sm:%s311] %v340
                  %v342 = vld [vmem:[%s318 + $0x58] sm:%s311]
                  %343 = vst [vmem:[%s319 + $0x2c] sm:%s311] %v342
                  %v344 = vld [vmem:[%s318 + $0x60] sm:%s311]
                  %345 = vst [vmem:[%s319 + $0x30] sm:%s311] %v344
                $region71: #{tpu_custom_call.1} parent=58 // loop_footer
                  %s317 = sadd.s32 1, %s313
                $region72: #{tpu_custom_call.1} parent=58 // loop_footer_branch
                  %312 = sbr.rel target = $region68
                $region73: #{tpu_custom_call.1} parent=58 // loop_exit
                  _
              $region59: #{tpu_custom_call.1} parent=43 // pred_fallthru
                _
            $region44: #{tpu_custom_call.1} parent=39 // pred_fallthru
              _
            // Predicated region
            $region45: #{tpu_custom_call.1} parent=39 // pred_check
              _
            $region46: #{tpu_custom_call.1} parent=39 // pred_check_branch
              %263 = sbr.rel (0) target = $region48
            $region47: #{tpu_custom_call.1} parent=39 // pred_region
              %s265 = ssub.s32 16, 1
              loop: start=0, step=1, limit=1
              $region49: #{tpu_custom_call.1} parent=47 // loop_pre_header
                _
              $region50: #{tpu_custom_call.1} parent=47 // loop_header
                %s267 = sphi 0, %s271
                %p268 = scmp.ge.s32.totalorder %s267, 1
                %s272 = sphi %s257, %s257
                %s273 = sphi %s252, %s252
              $region51: #{tpu_custom_call.1} parent=47 // loop_header_branch
                %270 = sbr.rel (%p268) target = $region55
              $region52: #{tpu_custom_call.1} parent=47 // loop_body
                %v274 = vld [vmem:[%s272] sm:%s265]
                %275 = vst [vmem:[%s273] sm:%s265] %v274
                %v276 = vld [vmem:[%s272 + $0x8] sm:%s265]
                %277 = vst [vmem:[%s273 + $0x4] sm:%s265] %v276
                %v278 = vld [vmem:[%s272 + $0x10] sm:%s265]
                %279 = vst [vmem:[%s273 + $0x8] sm:%s265] %v278
                %v280 = vld [vmem:[%s272 + $0x18] sm:%s265]
                %281 = vst [vmem:[%s273 + $0xc] sm:%s265] %v280
                %v282 = vld [vmem:[%s272 + $0x20] sm:%s265]
                %283 = vst [vmem:[%s273 + $0x10] sm:%s265] %v282
                %v284 = vld [vmem:[%s272 + $0x28] sm:%s265]
                %285 = vst [vmem:[%s273 + $0x14] sm:%s265] %v284
                %v286 = vld [vmem:[%s272 + $0x30] sm:%s265]
                %287 = vst [vmem:[%s273 + $0x18] sm:%s265] %v286
                %v288 = vld [vmem:[%s272 + $0x38] sm:%s265]
                %289 = vst [vmem:[%s273 + $0x1c] sm:%s265] %v288
                %v290 = vld [vmem:[%s272 + $0x40] sm:%s265]
                %291 = vst [vmem:[%s273 + $0x20] sm:%s265] %v290
                %v292 = vld [vmem:[%s272 + $0x48] sm:%s265]
                %293 = vst [vmem:[%s273 + $0x24] sm:%s265] %v292
                %v294 = vld [vmem:[%s272 + $0x50] sm:%s265]
                %295 = vst [vmem:[%s273 + $0x28] sm:%s265] %v294
                %v296 = vld [vmem:[%s272 + $0x58] sm:%s265]
                %297 = vst [vmem:[%s273 + $0x2c] sm:%s265] %v296
                %v298 = vld [vmem:[%s272 + $0x60] sm:%s265]
                %299 = vst [vmem:[%s273 + $0x30] sm:%s265] %v298
              $region53: #{tpu_custom_call.1} parent=47 // loop_footer
                %s271 = sadd.s32 1, %s267
              $region54: #{tpu_custom_call.1} parent=47 // loop_footer_branch
                %266 = sbr.rel target = $region50
              $region55: #{tpu_custom_call.1} parent=47 // loop_exit
                _
            $region48: #{tpu_custom_call.1} parent=39 // pred_fallthru
              _
          $region40: #{tpu_custom_call.1} parent=35 // pred_fallthru
            _
          %346 = vnop
        $region36: #{tpu_custom_call.1} parent=31 // pred_fallthru
          _
        // Predicated region
        $region74: #{tpu_custom_call.1} parent=31 // pred_check
          %p347 = pneg %p73
        $region75: #{tpu_custom_call.1} parent=31 // pred_check_branch
          %349 = sbr.rel (%p347) target = $region77
        $region76: #{tpu_custom_call.1} parent=31 // pred_region
          %s350 = smul.u32 16, %s21
          %p351 = scmp.lt.s32.totalorder %s350, 31
          %s352 = scalar_select %p351, %s350, 31
          %s353 = smul.addr %s352, 4
          %s354 = scalar_lea.vmem %s1, %s353
          %s355 = smul.u32 16, %s21
        $region77: #{tpu_custom_call.1} parent=31 // pred_fallthru
          _
        // Predicated region
        $region78: #{tpu_custom_call.1} parent=31 // pred_check
          %p356 = pneg %p99
        $region79: #{tpu_custom_call.1} parent=31 // pred_check_branch
          %358 = sbr.rel (%p356) target = $region81
        $region80: #{tpu_custom_call.1} parent=31 // pred_region
          %s359 = smul.u32 13, %s20
          %p360 = scmp.lt.s32.totalorder %s359, 25
          %s361 = scalar_select %p360, %s359, 25
          %s362 = smul.addr %s361, 8
          %s363 = scalar_lea.vmem %s2, %s362
          %s364 = smul.u32 13, %s20
        $region81: #{tpu_custom_call.1} parent=31 // pred_fallthru
          _
      $region32: #{tpu_custom_call.1} parent=5 // pred_fallthru
        _
      %p365 = scmp.le.s32.totalorder 1, %s13
      %p366 = scmp.lt.s32.totalorder %s13, 5
      %p367 = pnand %p365, %p366
      %p368 = pneg %p367
      // Predicated region
      $region82: #{tpu_custom_call.1} parent=5 // pred_check
        _
      $region83: #{tpu_custom_call.1} parent=5 // pred_check_branch
        %370 = sbr.rel (%p367) target = $region85
      $region84: #{tpu_custom_call.1} parent=5 // pred_region
        %s371 = ssub.s32 %s13, 1
        %s372 = sand.u32 %s40, 1
        %s373 = sand.u32 %s40, 1
        %s374 = smul.addr %s373, 52
        %s375 = scalar_lea.vmem [#allocation3], %s374
        // Predicated region
        $region86: #{tpu_custom_call.1} parent=84 // pred_check
          %p376 = pneg %p53
        $region87: #{tpu_custom_call.1} parent=84 // pred_check_branch
          %378 = sbr.rel (%p376) target = $region89
        $region88: #{tpu_custom_call.1} parent=84 // pred_region
          _
        $region89: #{tpu_custom_call.1} parent=84 // pred_fallthru
          _
        %s379 = sand.u32 %s40, 1
        %s380 = sand.u32 %s40, 1
        %s381 = smul.addr %s380, 52
        %s382 = scalar_lea.vmem [#allocation3], %s381
        %p383 = pneg %p53
        %p384 = pneg %p50
        %s385 = smul.u32 16, %s23
        %p386 = scmp.lt.s32.totalorder %s385, 31
        %s387 = scalar_select %p386, %s385, 31
        %s388 = smul.addr %s387, 4
        %s389 = scalar_lea.vmem %s1, %s388
        %p390 = pneg %p79
        %p391 = pneg %p76
        %s392 = smul.u32 13, %s22
        %p393 = scmp.lt.s32.totalorder %s392, 25
        %s394 = scalar_select %p393, %s392, 25
        %s395 = smul.addr %s394, 8
        %s396 = scalar_lea.vmem %s2, %s395
        %p397 = pneg %p105
        %p398 = pneg %p102
        %p399 = pneg %p126
        %p400 = pneg %p123
        %p401 = pneg %p147
        %p402 = pneg %p144
        %p403 = pneg %p168
        %p404 = pneg %p165
        %p405 = pneg %p189
        %p406 = pneg %p186
        %p407 = pneg %p215
        %p408 = pneg %p212
        %s409 = smul.u32 13, %s22
        %p410 = scmp.lt.s32.totalorder %s409, 25
        %s411 = scalar_select %p410, %s409, 25
        %s412 = smul.addr %s411, 8
        %s413 = scalar_lea.vmem %s7, %s412
        %s414 = smul.u32 13, %s22
        %s415 = smul.u32 16, %s23
        %p416 = scmp.lt.s32.totalorder %s415, 31
        %s417 = scalar_select %p416, %s415, 31
        %s418 = smul.addr %s417, 4
        %s419 = scalar_lea.vmem %s1, %s418
        %s420 = smul.u32 16, %s23
        %s421 = smul.u32 13, %s22
        %p422 = scmp.lt.s32.totalorder %s421, 25
        %s423 = scalar_select %p422, %s421, 25
        %s424 = smul.addr %s423, 8
        %s425 = scalar_lea.vmem %s2, %s424
        %s426 = smul.u32 13, %s22
        %s427 = smul.u32 13, %s22
        %p428 = scmp.lt.s32.totalorder %s427, 25
        %s429 = scalar_select %p428, %s427, 25
        %s430 = smul.addr %s429, 8
        %s431 = scalar_lea.vmem %s7, %s430
        %s432 = smul.u32 13, %s22
        %p434 = scmp.eq.s32.totalorder %s23, 0
        // Predicated region
        $region90: #{tpu_custom_call.1} parent=84 // pred_check
          %p435 = pneg %p434
        $region91: #{tpu_custom_call.1} parent=84 // pred_check_branch
          %437 = sbr.rel (%p435) target = $region93
        $region92: #{tpu_custom_call.1} parent=84 // pred_region
          %vm438 = vcmask 539648
          %439 = vst.msk [vmem:[#allocation2] sm:$0xff] %vm438, 0.0
          %440 = vst.msk [vmem:[#allocation2 + $0x8] sm:$0xff] %vm438, 0.0
          %441 = vst.msk [vmem:[#allocation2 + $0x10] sm:$0xff] %vm438, 0.0
          %442 = vst.msk [vmem:[#allocation2 + $0x18] sm:$0xff] %vm438, 0.0
          %443 = vst.msk [vmem:[#allocation2 + $0x20] sm:$0xff] %vm438, 0.0
          %444 = vst.msk [vmem:[#allocation2 + $0x28] sm:$0xff] %vm438, 0.0
          %445 = vst.msk [vmem:[#allocation2 + $0x30] sm:$0xff] %vm438, 0.0
          %446 = vst.msk [vmem:[#allocation2 + $0x38] sm:$0xff] %vm438, 0.0
          %447 = vst.msk [vmem:[#allocation2 + $0x40] sm:$0xff] %vm438, 0.0
          %448 = vst.msk [vmem:[#allocation2 + $0x48] sm:$0xff] %vm438, 0.0
          %449 = vst.msk [vmem:[#allocation2 + $0x50] sm:$0xff] %vm438, 0.0
          %450 = vst.msk [vmem:[#allocation2 + $0x58] sm:$0xff] %vm438, 0.0
          %451 = vst.msk [vmem:[#allocation2 + $0x60] sm:$0xff] %vm438, 0.0
        $region93: #{tpu_custom_call.1} parent=84 // pred_fallthru
          _
        %v452 = vld [vmem:[#allocation2] sm:$0xff]
        %v453 = vld [vmem:[#allocation2 + $0x8] sm:$0xff]
        %v454 = vld [vmem:[#allocation2 + $0x10] sm:$0xff]
        %v455 = vld [vmem:[#allocation2 + $0x18] sm:$0xff]
        %v456 = vld [vmem:[#allocation2 + $0x20] sm:$0xff]
        %v457 = vld [vmem:[#allocation2 + $0x28] sm:$0xff]
        %v458 = vld [vmem:[#allocation2 + $0x30] sm:$0xff]
        %v459 = vld [vmem:[#allocation2 + $0x38] sm:$0xff]
        %v460 = vld [vmem:[#allocation2 + $0x40] sm:$0xff]
        %v461 = vld [vmem:[#allocation2 + $0x48] sm:$0xff]
        %v462 = vld [vmem:[#allocation2 + $0x50] sm:$0xff]
        %v463 = vld [vmem:[#allocation2 + $0x58] sm:$0xff]
        %v464 = vld [vmem:[#allocation2 + $0x60] sm:$0xff]
        %v465 = vld [vmem:[%s375] sm:$0xf]
        %v466 = vld [vmem:[%s375 + $0x4] sm:$0xf]
        %v467 = vld [vmem:[%s375 + $0x8] sm:$0xf]
        %v468 = vld [vmem:[%s375 + $0xc] sm:$0xf]
        %v469 = vld [vmem:[%s375 + $0x10] sm:$0xf]
        %v470 = vld [vmem:[%s375 + $0x14] sm:$0xf]
        %v471 = vld [vmem:[%s375 + $0x18] sm:$0xf]
        %v472 = vld [vmem:[%s375 + $0x1c] sm:$0xf]
        %v473 = vld [vmem:[%s375 + $0x20] sm:$0xf]
        %v474 = vld [vmem:[%s375 + $0x24] sm:$0xf]
        %v475 = vld [vmem:[%s375 + $0x28] sm:$0xf]
        %v476 = vld [vmem:[%s375 + $0x2c] sm:$0xf]
        %v477 = vld [vmem:[%s375 + $0x30] sm:$0xf]
        %v478 = vld [vmem:[%s419] sm:$0xf]
        %v479 = vld [vmem:[%s419 + $0x4] sm:$0xf]
        %v480 = vld [vmem:[%s419 + $0x8] sm:$0xf]
        %v481 = vld [vmem:[%s419 + $0xc] sm:$0xf]
        %v482 = vld [vmem:[%s419 + $0x10] sm:$0xf]
        %v483 = vld [vmem:[%s419 + $0x14] sm:$0xf]
        %v484 = vld [vmem:[%s419 + $0x18] sm:$0xf]
        %v485 = vld [vmem:[%s419 + $0x1c] sm:$0xf]
        %v486 = vld [vmem:[%s419 + $0x20] sm:$0xf]
        %v487 = vld [vmem:[%s419 + $0x24] sm:$0xf]
        %v488 = vld [vmem:[%s419 + $0x28] sm:$0xf]
        %v489 = vld [vmem:[%s419 + $0x2c] sm:$0xf]
        %v490 = vld [vmem:[%s419 + $0x30] sm:$0xf]
        %v491 = vld [vmem:[%s419 + $0x34] sm:$0xf]
        %v492 = vld [vmem:[%s419 + $0x38] sm:$0xf]
        %v493 = vld [vmem:[%s419 + $0x3c] sm:$0xf]
        %v507 = vunpack.c.l.b16 %v465
        %v508 = vunpack.c.l.b16 %v466
        %v509 = vunpack.c.l.b16 %v467
        %v510 = vunpack.c.l.b16 %v468
        %v511 = vunpack.c.l.b16 %v469
        %v512 = vunpack.c.l.b16 %v470
        %v513 = vunpack.c.l.b16 %v471
        %v514 = vunpack.c.l.b16 %v472
        %v515 = vunpack.c.l.b16 %v473
        %v516 = vunpack.c.l.b16 %v474
        %v517 = vunpack.c.l.b16 %v475
        %v518 = vunpack.c.l.b16 %v476
        %v519 = vunpack.c.l.b16 %v477
        %v520 = vpack.c.b16 %v508, %v507
        %v521 = vpack.c.b16 %v510, %v509
        %v522 = vpack.c.b16 %v512, %v511
        %v523 = vpack.c.b16 %v514, %v513
        %v524 = vpack.c.b16 %v516, %v515
        %v525 = vpack.c.b16 %v518, %v517
        %v526 = vpack.c.b16 %v519, %v519
        %v550 = vunpack.c.l.b16 %v478
        %v551 = vunpack.c.l.b16 %v479
        %v552 = vunpack.c.l.b16 %v480
        %v553 = vunpack.c.l.b16 %v481
        %v554 = vunpack.c.l.b16 %v482
        %v555 = vunpack.c.l.b16 %v483
        %v556 = vunpack.c.l.b16 %v484
        %v557 = vunpack.c.l.b16 %v485
        %v558 = vunpack.c.l.b16 %v486
        %v559 = vunpack.c.l.b16 %v487
        %v560 = vunpack.c.l.b16 %v488
        %v561 = vunpack.c.l.b16 %v489
        %v562 = vunpack.c.l.b16 %v490
        %v563 = vunpack.c.l.b16 %v491
        %v564 = vunpack.c.l.b16 %v492
        %v565 = vunpack.c.l.b16 %v493
        %v566 = vpack.c.b16 %v551, %v550
        %v567 = vpack.c.b16 %v553, %v552
        %v568 = vpack.c.b16 %v555, %v554
        %v569 = vpack.c.b16 %v557, %v556
        %v570 = vpack.c.b16 %v559, %v558
        %v571 = vpack.c.b16 %v561, %v560
        %v572 = vpack.c.b16 %v563, %v562
        %v573 = vpack.c.b16 %v565, %v564
        %582 = vmatprep.subr.bf16.mxu0 0
        %583 = vmatpush1.bf16.msra.mxu0 %v573
        %584 = vmatprep.subr.bf16.mxu0 0
        %585 = vmatpush1.bf16.msra.mxu0 %v572
        %586 = vmatprep.subr.bf16.mxu0 0
        %587 = vmatpush1.bf16.msra.mxu0 %v571
        %588 = vmatprep.subr.bf16.mxu0 0
        %589 = vmatpush1.bf16.msra.mxu0 %v570
        %590 = vmatprep.subr.bf16.mxu0 0
        %591 = vmatpush1.bf16.msra.mxu0 %v569
        %592 = vmatprep.subr.bf16.mxu0 0
        %593 = vmatpush1.bf16.msra.mxu0 %v568
        %594 = vmatprep.subr.bf16.mxu0 0
        %595 = vmatpush1.bf16.msra.mxu0 %v567
        %596 = vmatprep.subr.bf16.mxu0 0
        %597 = vmatpush1.bf16.msra.mxu0 %v566
        %598 = vmatprep.subr.bf16.mxu0 0
        %599 = vmatpush2.bf16.msra.mxu0 0
        %600 = vmatprep.subr.bf16.mxu0 0
        %601 = vmatpush2.bf16.msra.mxu0 0
        %602 = vmatprep.subr.bf16.mxu0 0
        %603 = vmatpush2.bf16.msra.mxu0 0
        %604 = vmatprep.subr.bf16.mxu0 0
        %605 = vmatpush2.bf16.msra.mxu0 0
        %606 = vmatprep.subr.bf16.mxu0 0
        %607 = vmatpush2.bf16.msra.mxu0 0
        %608 = vmatprep.subr.bf16.mxu0 0
        %609 = vmatpush2.bf16.msra.mxu0 0
        %610 = vmatprep.subr.bf16.mxu0 0
        %611 = vmatpush2.bf16.msra.mxu0 0
        %612 = vmatprep.subr.bf16.mxu0 0
        %613 = vmatpush2.bf16.msra.mxu0 0
        %614 = vmatprep.mubr.bf16.mxu0 0
        %615 = vmatmul.mubr.bf16.gmra.mxu0 %v520
        %v616 = vpop.f32.mrf.mxu0
        %v617 = vadd.f32 0.0, %v616
        %v618 = vpop.f32.mrf.mxu0
        %v619 = vpop.f32.mrf.mxu0
        %v620 = vadd.f32 0.0, %v619
        %v621 = vpop.f32.mrf.mxu0
        %622 = vmatprep.mubr.bf16.mxu0 0
        %623 = vmatmul.mubr.bf16.gmra.mxu0 %v521
        %v624 = vpop.f32.mrf.mxu0
        %v625 = vadd.f32 0.0, %v624
        %v626 = vpop.f32.mrf.mxu0
        %v627 = vpop.f32.mrf.mxu0
        %v628 = vadd.f32 0.0, %v627
        %v629 = vpop.f32.mrf.mxu0
        %630 = vmatprep.mubr.bf16.mxu0 0
        %631 = vmatmul.mubr.bf16.gmra.mxu0 %v522
        %v632 = vpop.f32.mrf.mxu0
        %v633 = vadd.f32 0.0, %v632
        %v634 = vpop.f32.mrf.mxu0
        %v635 = vpop.f32.mrf.mxu0
        %v636 = vadd.f32 0.0, %v635
        %v637 = vpop.f32.mrf.mxu0
        %638 = vmatprep.mubr.bf16.mxu0 0
        %639 = vmatmul.mubr.bf16.gmra.mxu0 %v523
        %v640 = vpop.f32.mrf.mxu0
        %v641 = vadd.f32 0.0, %v640
        %v642 = vpop.f32.mrf.mxu0
        %v643 = vpop.f32.mrf.mxu0
        %v644 = vadd.f32 0.0, %v643
        %v645 = vpop.f32.mrf.mxu0
        %646 = vmatprep.mubr.bf16.mxu0 0
        %647 = vmatmul.mubr.bf16.gmra.mxu0 %v524
        %v648 = vpop.f32.mrf.mxu0
        %v649 = vadd.f32 0.0, %v648
        %v650 = vpop.f32.mrf.mxu0
        %v651 = vpop.f32.mrf.mxu0
        %v652 = vadd.f32 0.0, %v651
        %v653 = vpop.f32.mrf.mxu0
        %654 = vmatprep.mubr.bf16.mxu0 0
        %655 = vmatmul.mubr.bf16.gmra.mxu0 %v525
        %v656 = vpop.f32.mrf.mxu0
        %v657 = vadd.f32 0.0, %v656
        %v658 = vpop.f32.mrf.mxu0
        %v659 = vpop.f32.mrf.mxu0
        %v660 = vadd.f32 0.0, %v659
        %v661 = vpop.f32.mrf.mxu0
        %662 = vmatprep.mubr.bf16.mxu0 0
        %663 = vmatmul.mubr.bf16.gmra.mxu0 %v526
        %v664 = vpop.f32.mrf.mxu0
        %v665 = vadd.f32 0.0, %v664
        %v666 = vpop.f32.mrf.mxu0
        %v667 = vpop.f32.mrf.mxu0
        %v668 = vpop.f32.mrf.mxu0
        %669 = vdwg.mxu0
        %v670 = vadd.f32 %v452, %v617
        %v671 = vadd.f32 %v453, %v620
        %v672 = vadd.f32 %v454, %v625
        %v673 = vadd.f32 %v455, %v628
        %v674 = vadd.f32 %v456, %v633
        %v675 = vadd.f32 %v457, %v636
        %v676 = vadd.f32 %v458, %v641
        %v677 = vadd.f32 %v459, %v644
        %v678 = vadd.f32 %v460, %v649
        %v679 = vadd.f32 %v461, %v652
        %v680 = vadd.f32 %v462, %v657
        %v681 = vadd.f32 %v463, %v660
        %v682 = vadd.f32 %v464, %v665
        %vm683 = vcmask 539648
        %684 = vst.msk [vmem:[#allocation2] sm:$0xff] %vm683, %v670
        %685 = vst.msk [vmem:[#allocation2 + $0x8] sm:$0xff] %vm683, %v671
        %686 = vst.msk [vmem:[#allocation2 + $0x10] sm:$0xff] %vm683, %v672
        %687 = vst.msk [vmem:[#allocation2 + $0x18] sm:$0xff] %vm683, %v673
        %688 = vst.msk [vmem:[#allocation2 + $0x20] sm:$0xff] %vm683, %v674
        %689 = vst.msk [vmem:[#allocation2 + $0x28] sm:$0xff] %vm683, %v675
        %690 = vst.msk [vmem:[#allocation2 + $0x30] sm:$0xff] %vm683, %v676
        %691 = vst.msk [vmem:[#allocation2 + $0x38] sm:$0xff] %vm683, %v677
        %692 = vst.msk [vmem:[#allocation2 + $0x40] sm:$0xff] %vm683, %v678
        %693 = vst.msk [vmem:[#allocation2 + $0x48] sm:$0xff] %vm683, %v679
        %694 = vst.msk [vmem:[#allocation2 + $0x50] sm:$0xff] %vm683, %v680
        %695 = vst.msk [vmem:[#allocation2 + $0x58] sm:$0xff] %vm683, %v681
        %696 = vst.msk [vmem:[#allocation2 + $0x60] sm:$0xff] %vm683, %v682
        %p697 = scmp.eq.s32.totalorder %s23, 1
        // Predicated region
        $region94: #{tpu_custom_call.1} parent=84 // pred_check
          %p698 = pneg %p697
        $region95: #{tpu_custom_call.1} parent=84 // pred_check_branch
          %700 = sbr.rel (%p698) target = $region97
        $region96: #{tpu_custom_call.1} parent=84 // pred_region
          %v701 = vld [vmem:[#allocation2] sm:$0xff]
          %v702 = vld [vmem:[#allocation2 + $0x8] sm:$0xff]
          %v703 = vld [vmem:[#allocation2 + $0x10] sm:$0xff]
          %v704 = vld [vmem:[#allocation2 + $0x18] sm:$0xff]
          %v705 = vld [vmem:[#allocation2 + $0x20] sm:$0xff]
          %v706 = vld [vmem:[#allocation2 + $0x28] sm:$0xff]
          %v707 = vld [vmem:[#allocation2 + $0x30] sm:$0xff]
          %v708 = vld [vmem:[#allocation2 + $0x38] sm:$0xff]
          %v709 = vld [vmem:[#allocation2 + $0x40] sm:$0xff]
          %v710 = vld [vmem:[#allocation2 + $0x48] sm:$0xff]
          %v711 = vld [vmem:[#allocation2 + $0x50] sm:$0xff]
          %v712 = vld [vmem:[#allocation2 + $0x58] sm:$0xff]
          %v713 = vld [vmem:[#allocation2 + $0x60] sm:$0xff]
          %727 = vrot.lane.b32.xlu0 %v701, 95
          %v728 = vpop.permute.xlu0 %727
          %729 = vrot.lane.b32.xlu0 %v702, 95
          %v730 = vpop.permute.xlu0 %729
          %731 = vrot.lane.b32.xlu0 %v703, 95
          %v732 = vpop.permute.xlu0 %731
          %733 = vrot.lane.b32.xlu0 %v704, 95
          %v734 = vpop.permute.xlu0 %733
          %735 = vrot.lane.b32.xlu0 %v705, 95
          %v736 = vpop.permute.xlu0 %735
          %737 = vrot.lane.b32.xlu0 %v706, 95
          %v738 = vpop.permute.xlu0 %737
          %739 = vrot.lane.b32.xlu0 %v707, 95
          %v740 = vpop.permute.xlu0 %739
          %741 = vrot.lane.b32.xlu0 %v708, 95
          %v742 = vpop.permute.xlu0 %741
          %743 = vrot.lane.b32.xlu0 %v709, 95
          %v744 = vpop.permute.xlu0 %743
          %745 = vrot.lane.b32.xlu0 %v710, 95
          %v746 = vpop.permute.xlu0 %745
          %747 = vrot.lane.b32.xlu0 %v711, 95
          %v748 = vpop.permute.xlu0 %747
          %749 = vrot.lane.b32.xlu0 %v712, 95
          %v750 = vpop.permute.xlu0 %749
          %751 = vrot.lane.b32.xlu0 %v713, 95
          %v752 = vpop.permute.xlu0 %751
          %v766 = vadd.f32 %v701, %v728
          %v767 = vadd.f32 %v702, %v730
          %v768 = vadd.f32 %v703, %v732
          %v769 = vadd.f32 %v704, %v734
          %v770 = vadd.f32 %v705, %v736
          %v771 = vadd.f32 %v706, %v738
          %v772 = vadd.f32 %v707, %v740
          %v773 = vadd.f32 %v708, %v742
          %v774 = vadd.f32 %v709, %v744
          %v775 = vadd.f32 %v710, %v746
          %v776 = vadd.f32 %v711, %v748
          %v777 = vadd.f32 %v712, %v750
          %v778 = vadd.f32 %v713, %v752
          %v779 = vadd.f32 %v766, 1.0
          %v780 = vadd.f32 %v767, 1.0
          %v781 = vadd.f32 %v768, 1.0
          %v782 = vadd.f32 %v769, 1.0
          %v783 = vadd.f32 %v770, 1.0
          %v784 = vadd.f32 %v771, 1.0
          %v785 = vadd.f32 %v772, 1.0
          %v786 = vadd.f32 %v773, 1.0
          %v787 = vadd.f32 %v774, 1.0
          %v788 = vadd.f32 %v775, 1.0
          %v789 = vadd.f32 %v776, 1.0
          %v790 = vadd.f32 %v777, 1.0
          %v791 = vadd.f32 %v778, 1.0
          %v792 = vrcp.pop %v779
          %v793 = vrcp.pop %v780
          %v794 = vrcp.pop %v781
          %v795 = vrcp.pop %v782
          %v796 = vrcp.pop %v783
          %v797 = vrcp.pop %v784
          %v798 = vrcp.pop %v785
          %v799 = vrcp.pop %v786
          %v800 = vrcp.pop %v787
          %v801 = vrcp.pop %v788
          %v802 = vrcp.pop %v789
          %v803 = vrcp.pop %v790
          %v804 = vrcp.pop %v791
          %806 = vset.pattern.permute.xlu0 32
          %807 = vperm.xlu0 %806, %v792
          %v808 = vpop.permute.xlu0 %807
          %811 = vset.pattern.permute.xlu0 32
          %812 = vperm.xlu0 %811, %v793
          %v813 = vpop.permute.xlu0 %812
          %816 = vset.pattern.permute.xlu0 32
          %817 = vperm.xlu0 %816, %v794
          %v818 = vpop.permute.xlu0 %817
          %821 = vset.pattern.permute.xlu0 32
          %822 = vperm.xlu0 %821, %v795
          %v823 = vpop.permute.xlu0 %822
          %826 = vset.pattern.permute.xlu0 32
          %827 = vperm.xlu0 %826, %v796
          %v828 = vpop.permute.xlu0 %827
          %831 = vset.pattern.permute.xlu0 32
          %832 = vperm.xlu0 %831, %v797
          %v833 = vpop.permute.xlu0 %832
          %836 = vset.pattern.permute.xlu0 32
          %837 = vperm.xlu0 %836, %v798
          %v838 = vpop.permute.xlu0 %837
          %841 = vset.pattern.permute.xlu0 32
          %842 = vperm.xlu0 %841, %v799
          %v843 = vpop.permute.xlu0 %842
          %846 = vset.pattern.permute.xlu0 32
          %847 = vperm.xlu0 %846, %v800
          %v848 = vpop.permute.xlu0 %847
          %851 = vset.pattern.permute.xlu0 32
          %852 = vperm.xlu0 %851, %v801
          %v853 = vpop.permute.xlu0 %852
          %856 = vset.pattern.permute.xlu0 32
          %857 = vperm.xlu0 %856, %v802
          %v858 = vpop.permute.xlu0 %857
          %861 = vset.pattern.permute.xlu0 32
          %862 = vperm.xlu0 %861, %v803
          %v863 = vpop.permute.xlu0 %862
          %866 = vset.pattern.permute.xlu0 32
          %867 = vperm.xlu0 %866, %v804
          %v868 = vpop.permute.xlu0 %867
          %v870 = vmul.f32 %v766, %v808
          %v871 = vmul.f32 %v767, %v813
          %v872 = vmul.f32 %v768, %v818
          %v873 = vmul.f32 %v769, %v823
          %v874 = vmul.f32 %v770, %v828
          %v875 = vmul.f32 %v771, %v833
          %v876 = vmul.f32 %v772, %v838
          %v877 = vmul.f32 %v773, %v843
          %v878 = vmul.f32 %v774, %v848
          %v879 = vmul.f32 %v775, %v853
          %v880 = vmul.f32 %v776, %v858
          %v881 = vmul.f32 %v777, %v863
          %v882 = vmul.f32 %v778, %v868
          %v883 = vld [vmem:[%s425] sm:$0xff]
          %v884 = vld [vmem:[%s425 + $0x8] sm:$0xff]
          %v885 = vld [vmem:[%s425 + $0x10] sm:$0xff]
          %v886 = vld [vmem:[%s425 + $0x18] sm:$0xff]
          %v887 = vld [vmem:[%s425 + $0x20] sm:$0xff]
          %v888 = vld [vmem:[%s425 + $0x28] sm:$0xff]
          %v889 = vld [vmem:[%s425 + $0x30] sm:$0xff]
          %v890 = vld [vmem:[%s425 + $0x38] sm:$0xff]
          %v891 = vld [vmem:[%s425 + $0x40] sm:$0xff]
          %v892 = vld [vmem:[%s425 + $0x48] sm:$0xff]
          %v893 = vld [vmem:[%s425 + $0x50] sm:$0xff]
          %v894 = vld [vmem:[%s425 + $0x58] sm:$0xff]
          %v895 = vld [vmem:[%s425 + $0x60] sm:$0xff]
          %v896 = vld [vmem:[%s3] sm:$0xff]
          %v897 = vld [vmem:[%s3 + $0x8] sm:$0xff]
          %v898 = vld [vmem:[%s3 + $0x10] sm:$0xff]
          %v899 = vld [vmem:[%s3 + $0x18] sm:$0xff]
          %v900 = vld [vmem:[%s3 + $0x20] sm:$0x1]
          %v901 = vld [vmem:[%s4] sm:$0xff]
          %v902 = vld [vmem:[%s4 + $0x8] sm:$0xff]
          %v903 = vld [vmem:[%s4 + $0x10] sm:$0xff]
          %v904 = vld [vmem:[%s4 + $0x18] sm:$0xff]
          %v905 = vld [vmem:[%s4 + $0x20] sm:$0x1]
          %vm906 = vcmask 269312
          %v908 = vsel %vm906, %v870, 0
          %v911 = vsel %vm906, %v871, 0
          %v914 = vsel %vm906, %v872, 0
          %v917 = vsel %vm906, %v873, 0
          %v920 = vsel %vm906, %v874, 0
          %v923 = vsel %vm906, %v875, 0
          %v926 = vsel %vm906, %v876, 0
          %v929 = vsel %vm906, %v877, 0
          %v932 = vsel %vm906, %v878, 0
          %v935 = vsel %vm906, %v879, 0
          %v938 = vsel %vm906, %v880, 0
          %v941 = vsel %vm906, %v881, 0
          %v944 = vsel %vm906, %v882, 0
          %vm946 = vcmask 1040384
          %v948 = vsel %vm946, %v905, 0
          %950 = vmatprep.subr.mxu0 0.0
          %951 = vmatpush1.msra.mxu0 0.0
          %952 = vmatprep.subr.mxu0 0.0
          %953 = vmatpush1.msra.mxu0 0.0
          %954 = vmatprep.subr.mxu0 0.0
          %955 = vmatpush1.msra.mxu0 0.0
          %956 = vmatprep.subr.mxu0 0.0
          %957 = vmatpush1.msra.mxu0 0.0
          %958 = vmatprep.subr.mxu0 0.0
          %959 = vmatpush1.msra.mxu0 0.0
          %960 = vmatprep.subr.mxu0 0.0
          %961 = vmatpush1.msra.mxu0 0.0
          %962 = vmatprep.subr.mxu0 0.0
          %963 = vmatpush1.msra.mxu0 0.0
          %964 = vmatprep.subr.mxu0 0.0
          %965 = vmatpush1.msra.mxu0 0.0
          %966 = vmatprep.subr.mxu0 0.0
          %967 = vmatpush1.msra.mxu0 0.0
          %968 = vmatprep.subr.mxu0 0.0
          %969 = vmatpush1.msra.mxu0 0.0
          %970 = vmatprep.subr.mxu0 0.0
          %971 = vmatpush1.msra.mxu0 0.0
          %972 = vmatprep.subr.mxu0 0.0
          %973 = vmatpush1.msra.mxu0 %v948
          %974 = vmatprep.subr.mxu0 0.0
          %975 = vmatpush1.msra.mxu0 %v904
          %976 = vmatprep.subr.mxu0 0.0
          %977 = vmatpush1.msra.mxu0 %v903
          %978 = vmatprep.subr.mxu0 0.0
          %979 = vmatpush1.msra.mxu0 %v902
          %980 = vmatprep.subr.mxu0 0.0
          %981 = vmatpush1.msra.mxu0 %v901
          %982 = vmatprep.subr.mxu0 0.0
          %983 = vmatpush2.msra.mxu0 0.0
          %984 = vmatprep.subr.mxu0 0.0
          %985 = vmatpush2.msra.mxu0 0.0
          %986 = vmatprep.subr.mxu0 0.0
          %987 = vmatpush2.msra.mxu0 0.0
          %988 = vmatprep.subr.mxu0 0.0
          %989 = vmatpush2.msra.mxu0 0.0
          %990 = vmatprep.subr.mxu0 0.0
          %991 = vmatpush2.msra.mxu0 0.0
          %992 = vmatprep.subr.mxu0 0.0
          %993 = vmatpush2.msra.mxu0 0.0
          %994 = vmatprep.subr.mxu0 0.0
          %995 = vmatpush2.msra.mxu0 0.0
          %996 = vmatprep.subr.mxu0 0.0
          %997 = vmatpush2.msra.mxu0 0.0
          %998 = vmatprep.subr.mxu0 0.0
          %999 = vmatpush2.msra.mxu0 0.0
          %1000 = vmatprep.subr.mxu0 0.0
          %1001 = vmatpush2.msra.mxu0 0.0
          %1002 = vmatprep.subr.mxu0 0.0
          %1003 = vmatpush2.msra.mxu0 0.0
          %1004 = vmatprep.subr.mxu0 0.0
          %1005 = vmatpush2.msra.mxu0 0.0
          %1006 = vmatprep.subr.mxu0 0.0
          %1007 = vmatpush2.msra.mxu0 0.0
          %1008 = vmatprep.subr.mxu0 0.0
          %1009 = vmatpush2.msra.mxu0 0.0
          %1010 = vmatprep.subr.mxu0 0.0
          %1011 = vmatpush2.msra.mxu0 0.0
          %1012 = vmatprep.subr.mxu0 0.0
          %1013 = vmatpush2.msra.mxu0 0.0
          %1014 = vmatprep.mubr.f32.mxu0 0.0
          %1015 = vmatmul.mubr.f32.gmra.mxu0 %v908
          %v1016 = vpop.f32.mrf.mxu0
          %v1017 = vadd.f32 0.0, %v1016
          %v1018 = vpop.f32.mrf.mxu0
          %1019 = vmatprep.mubr.f32.mxu0 0.0
          %1020 = vmatmul.mubr.f32.gmra.mxu0 %v911
          %v1021 = vpop.f32.mrf.mxu0
          %v1022 = vadd.f32 0.0, %v1021
          %v1023 = vpop.f32.mrf.mxu0
          %1024 = vmatprep.mubr.f32.mxu0 0.0
          %1025 = vmatmul.mubr.f32.gmra.mxu0 %v914
          %v1026 = vpop.f32.mrf.mxu0
          %v1027 = vadd.f32 0.0, %v1026
          %v1028 = vpop.f32.mrf.mxu0
          %1029 = vmatprep.mubr.f32.mxu0 0.0
          %1030 = vmatmul.mubr.f32.gmra.mxu0 %v917
          %v1031 = vpop.f32.mrf.mxu0
          %v1032 = vadd.f32 0.0, %v1031
          %v1033 = vpop.f32.mrf.mxu0
          %1034 = vmatprep.mubr.f32.mxu0 0.0
          %1035 = vmatmul.mubr.f32.gmra.mxu0 %v920
          %v1036 = vpop.f32.mrf.mxu0
          %v1037 = vadd.f32 0.0, %v1036
          %v1038 = vpop.f32.mrf.mxu0
          %1039 = vmatprep.mubr.f32.mxu0 0.0
          %1040 = vmatmul.mubr.f32.gmra.mxu0 %v923
          %v1041 = vpop.f32.mrf.mxu0
          %v1042 = vadd.f32 0.0, %v1041
          %v1043 = vpop.f32.mrf.mxu0
          %1044 = vmatprep.mubr.f32.mxu0 0.0
          %1045 = vmatmul.mubr.f32.gmra.mxu0 %v926
          %v1046 = vpop.f32.mrf.mxu0
          %v1047 = vadd.f32 0.0, %v1046
          %v1048 = vpop.f32.mrf.mxu0
          %1049 = vmatprep.mubr.f32.mxu0 0.0
          %1050 = vmatmul.mubr.f32.gmra.mxu0 %v929
          %v1051 = vpop.f32.mrf.mxu0
          %v1052 = vadd.f32 0.0, %v1051
          %v1053 = vpop.f32.mrf.mxu0
          %1054 = vmatprep.mubr.f32.mxu0 0.0
          %1055 = vmatmul.mubr.f32.gmra.mxu0 %v932
          %v1056 = vpop.f32.mrf.mxu0
          %v1057 = vadd.f32 0.0, %v1056
          %v1058 = vpop.f32.mrf.mxu0
          %1059 = vmatprep.mubr.f32.mxu0 0.0
          %1060 = vmatmul.mubr.f32.gmra.mxu0 %v935
          %v1061 = vpop.f32.mrf.mxu0
          %v1062 = vadd.f32 0.0, %v1061
          %v1063 = vpop.f32.mrf.mxu0
          %1064 = vmatprep.mubr.f32.mxu0 0.0
          %1065 = vmatmul.mubr.f32.gmra.mxu0 %v938
          %v1066 = vpop.f32.mrf.mxu0
          %v1067 = vadd.f32 0.0, %v1066
          %v1068 = vpop.f32.mrf.mxu0
          %1069 = vmatprep.mubr.f32.mxu0 0.0
          %1070 = vmatmul.mubr.f32.gmra.mxu0 %v941
          %v1071 = vpop.f32.mrf.mxu0
          %v1072 = vadd.f32 0.0, %v1071
          %v1073 = vpop.f32.mrf.mxu0
          %1074 = vmatprep.mubr.f32.mxu0 0.0
          %1075 = vmatmul.mubr.f32.gmra.mxu0 %v944
          %v1076 = vpop.f32.mrf.mxu0
          %v1077 = vadd.f32 0.0, %v1076
          %v1078 = vpop.f32.mrf.mxu0
          %1079 = vdwg.mxu0
          %v1081 = vsel %vm906, %v883, 0
          %v1084 = vsel %vm906, %v884, 0
          %v1087 = vsel %vm906, %v885, 0
          %v1090 = vsel %vm906, %v886, 0
          %v1093 = vsel %vm906, %v887, 0
          %v1096 = vsel %vm906, %v888, 0
          %v1099 = vsel %vm906, %v889, 0
          %v1102 = vsel %vm906, %v890, 0
          %v1105 = vsel %vm906, %v891, 0
          %v1108 = vsel %vm906, %v892, 0
          %v1111 = vsel %vm906, %v893, 0
          %v1114 = vsel %vm906, %v894, 0
          %v1117 = vsel %vm906, %v895, 0
          %v1120 = vsel %vm946, %v900, 0
          %1122 = vmatprep.subr.mxu0 0.0
          %1123 = vmatpush1.msra.mxu0 0.0
          %1124 = vmatprep.subr.mxu0 0.0
          %1125 = vmatpush1.msra.mxu0 0.0
          %1126 = vmatprep.subr.mxu0 0.0
          %1127 = vmatpush1.msra.mxu0 0.0
          %1128 = vmatprep.subr.mxu0 0.0
          %1129 = vmatpush1.msra.mxu0 0.0
          %1130 = vmatprep.subr.mxu0 0.0
          %1131 = vmatpush1.msra.mxu0 0.0
          %1132 = vmatprep.subr.mxu0 0.0
          %1133 = vmatpush1.msra.mxu0 0.0
          %1134 = vmatprep.subr.mxu0 0.0
          %1135 = vmatpush1.msra.mxu0 0.0
          %1136 = vmatprep.subr.mxu0 0.0
          %1137 = vmatpush1.msra.mxu0 0.0
          %1138 = vmatprep.subr.mxu0 0.0
          %1139 = vmatpush1.msra.mxu0 0.0
          %1140 = vmatprep.subr.mxu0 0.0
          %1141 = vmatpush1.msra.mxu0 0.0
          %1142 = vmatprep.subr.mxu0 0.0
          %1143 = vmatpush1.msra.mxu0 0.0
          %1144 = vmatprep.subr.mxu0 0.0
          %1145 = vmatpush1.msra.mxu0 %v1120
          %1146 = vmatprep.subr.mxu0 0.0
          %1147 = vmatpush1.msra.mxu0 %v899
          %1148 = vmatprep.subr.mxu0 0.0
          %1149 = vmatpush1.msra.mxu0 %v898
          %1150 = vmatprep.subr.mxu0 0.0
          %1151 = vmatpush1.msra.mxu0 %v897
          %1152 = vmatprep.subr.mxu0 0.0
          %1153 = vmatpush1.msra.mxu0 %v896
          %1154 = vmatprep.subr.mxu0 0.0
          %1155 = vmatpush2.msra.mxu0 0.0
          %1156 = vmatprep.subr.mxu0 0.0
          %1157 = vmatpush2.msra.mxu0 0.0
          %1158 = vmatprep.subr.mxu0 0.0
          %1159 = vmatpush2.msra.mxu0 0.0
          %1160 = vmatprep.subr.mxu0 0.0
          %1161 = vmatpush2.msra.mxu0 0.0
          %1162 = vmatprep.subr.mxu0 0.0
          %1163 = vmatpush2.msra.mxu0 0.0
          %1164 = vmatprep.subr.mxu0 0.0
          %1165 = vmatpush2.msra.mxu0 0.0
          %1166 = vmatprep.subr.mxu0 0.0
          %1167 = vmatpush2.msra.mxu0 0.0
          %1168 = vmatprep.subr.mxu0 0.0
          %1169 = vmatpush2.msra.mxu0 0.0
          %1170 = vmatprep.subr.mxu0 0.0
          %1171 = vmatpush2.msra.mxu0 0.0
          %1172 = vmatprep.subr.mxu0 0.0
          %1173 = vmatpush2.msra.mxu0 0.0
          %1174 = vmatprep.subr.mxu0 0.0
          %1175 = vmatpush2.msra.mxu0 0.0
          %1176 = vmatprep.subr.mxu0 0.0
          %1177 = vmatpush2.msra.mxu0 0.0
          %1178 = vmatprep.subr.mxu0 0.0
          %1179 = vmatpush2.msra.mxu0 0.0
          %1180 = vmatprep.subr.mxu0 0.0
          %1181 = vmatpush2.msra.mxu0 0.0
          %1182 = vmatprep.subr.mxu0 0.0
          %1183 = vmatpush2.msra.mxu0 0.0
          %1184 = vmatprep.subr.mxu0 0.0
          %1185 = vmatpush2.msra.mxu0 0.0
          %1186 = vmatprep.mubr.f32.mxu0 0.0
          %1187 = vmatmul.mubr.f32.gmra.mxu0 %v1081
          %v1188 = vpop.f32.mrf.mxu0
          %v1189 = vadd.f32 %v1017, %v1188
          %v1190 = vpop.f32.mrf.mxu0
          %1191 = vmatprep.mubr.f32.mxu0 0.0
          %1192 = vmatmul.mubr.f32.gmra.mxu0 %v1084
          %v1193 = vpop.f32.mrf.mxu0
          %v1194 = vadd.f32 %v1022, %v1193
          %v1195 = vpop.f32.mrf.mxu0
          %1196 = vmatprep.mubr.f32.mxu0 0.0
          %1197 = vmatmul.mubr.f32.gmra.mxu0 %v1087
          %v1198 = vpop.f32.mrf.mxu0
          %v1199 = vadd.f32 %v1027, %v1198
          %v1200 = vpop.f32.mrf.mxu0
          %1201 = vmatprep.mubr.f32.mxu0 0.0
          %1202 = vmatmul.mubr.f32.gmra.mxu0 %v1090
          %v1203 = vpop.f32.mrf.mxu0
          %v1204 = vadd.f32 %v1032, %v1203
          %v1205 = vpop.f32.mrf.mxu0
          %1206 = vmatprep.mubr.f32.mxu0 0.0
          %1207 = vmatmul.mubr.f32.gmra.mxu0 %v1093
          %v1208 = vpop.f32.mrf.mxu0
          %v1209 = vadd.f32 %v1037, %v1208
          %v1210 = vpop.f32.mrf.mxu0
          %1211 = vmatprep.mubr.f32.mxu0 0.0
          %1212 = vmatmul.mubr.f32.gmra.mxu0 %v1096
          %v1213 = vpop.f32.mrf.mxu0
          %v1214 = vadd.f32 %v1042, %v1213
          %v1215 = vpop.f32.mrf.mxu0
          %1216 = vmatprep.mubr.f32.mxu0 0.0
          %1217 = vmatmul.mubr.f32.gmra.mxu0 %v1099
          %v1218 = vpop.f32.mrf.mxu0
          %v1219 = vadd.f32 %v1047, %v1218
          %v1220 = vpop.f32.mrf.mxu0
          %1221 = vmatprep.mubr.f32.mxu0 0.0
          %1222 = vmatmul.mubr.f32.gmra.mxu0 %v1102
          %v1223 = vpop.f32.mrf.mxu0
          %v1224 = vadd.f32 %v1052, %v1223
          %v1225 = vpop.f32.mrf.mxu0
          %1226 = vmatprep.mubr.f32.mxu0 0.0
          %1227 = vmatmul.mubr.f32.gmra.mxu0 %v1105
          %v1228 = vpop.f32.mrf.mxu0
          %v1229 = vadd.f32 %v1057, %v1228
          %v1230 = vpop.f32.mrf.mxu0
          %1231 = vmatprep.mubr.f32.mxu0 0.0
          %1232 = vmatmul.mubr.f32.gmra.mxu0 %v1108
          %v1233 = vpop.f32.mrf.mxu0
          %v1234 = vadd.f32 %v1062, %v1233
          %v1235 = vpop.f32.mrf.mxu0
          %1236 = vmatprep.mubr.f32.mxu0 0.0
          %1237 = vmatmul.mubr.f32.gmra.mxu0 %v1111
          %v1238 = vpop.f32.mrf.mxu0
          %v1239 = vadd.f32 %v1067, %v1238
          %v1240 = vpop.f32.mrf.mxu0
          %1241 = vmatprep.mubr.f32.mxu0 0.0
          %1242 = vmatmul.mubr.f32.gmra.mxu0 %v1114
          %v1243 = vpop.f32.mrf.mxu0
          %v1244 = vadd.f32 %v1072, %v1243
          %v1245 = vpop.f32.mrf.mxu0
          %1246 = vmatprep.mubr.f32.mxu0 0.0
          %1247 = vmatmul.mubr.f32.gmra.mxu0 %v1117
          %v1248 = vpop.f32.mrf.mxu0
          %v1249 = vadd.f32 %v1077, %v1248
          %v1250 = vpop.f32.mrf.mxu0
          %1251 = vdwg.mxu0
          %v1252 = vmax.f32 %v1189, 0.0
          %v1253 = vmax.f32 %v1194, 0.0
          %v1254 = vmax.f32 %v1199, 0.0
          %v1255 = vmax.f32 %v1204, 0.0
          %v1256 = vmax.f32 %v1209, 0.0
          %v1257 = vmax.f32 %v1214, 0.0
          %v1258 = vmax.f32 %v1219, 0.0
          %v1259 = vmax.f32 %v1224, 0.0
          %v1260 = vmax.f32 %v1229, 0.0
          %v1261 = vmax.f32 %v1234, 0.0
          %v1262 = vmax.f32 %v1239, 0.0
          %v1263 = vmax.f32 %v1244, 0.0
          %v1264 = vmax.f32 %v1249, 0.0
          %v1265 = vld [vmem:[%s5] sm:$0xff]
          %v1266 = vld [vmem:[%s5 + $0x8] sm:$0xff]
          %v1267 = vld [vmem:[%s5 + $0x10] sm:$0xff]
          %v1268 = vld [vmem:[%s5 + $0x18] sm:$0xff]
          %v1269 = vld [vmem:[%s6] sm:$0x1]
          %v1271 = vlaneseq
          %v1272 = vshrl.u32 %v1271, 7
          %v1273 = vsub.s32 0, %v1272
          %v1274 = vrot.slane %v1269, %v1273
          %vm1276 = vcmask 261120
          %v1278 = vsel %vm1276, %v1252, 0
          %v1281 = vsel %vm1276, %v1253, 0
          %v1284 = vsel %vm1276, %v1254, 0
          %v1287 = vsel %vm1276, %v1255, 0
          %v1290 = vsel %vm1276, %v1256, 0
          %v1293 = vsel %vm1276, %v1257, 0
          %v1296 = vsel %vm1276, %v1258, 0
          %v1299 = vsel %vm1276, %v1259, 0
          %v1302 = vsel %vm1276, %v1260, 0
          %v1305 = vsel %vm1276, %v1261, 0
          %v1308 = vsel %vm1276, %v1262, 0
          %v1311 = vsel %vm1276, %v1263, 0
          %v1314 = vsel %vm1276, %v1264, 0
          %1316 = vmatprep.subr.mxu0 0.0
          %1317 = vmatpush1.msra.mxu0 0.0
          %1318 = vmatprep.subr.mxu0 0.0
          %1319 = vmatpush1.msra.mxu0 0.0
          %1320 = vmatprep.subr.mxu0 0.0
          %1321 = vmatpush1.msra.mxu0 0.0
          %1322 = vmatprep.subr.mxu0 0.0
          %1323 = vmatpush1.msra.mxu0 0.0
          %1324 = vmatprep.subr.mxu0 0.0
          %1325 = vmatpush1.msra.mxu0 0.0
          %1326 = vmatprep.subr.mxu0 0.0
          %1327 = vmatpush1.msra.mxu0 0.0
          %1328 = vmatprep.subr.mxu0 0.0
          %1329 = vmatpush1.msra.mxu0 0.0
          %1330 = vmatprep.subr.mxu0 0.0
          %1331 = vmatpush1.msra.mxu0 0.0
          %1332 = vmatprep.subr.mxu0 0.0
          %1333 = vmatpush1.msra.mxu0 0.0
          %1334 = vmatprep.subr.mxu0 0.0
          %1335 = vmatpush1.msra.mxu0 0.0
          %1336 = vmatprep.subr.mxu0 0.0
          %1337 = vmatpush1.msra.mxu0 0.0
          %1338 = vmatprep.subr.mxu0 0.0
          %1339 = vmatpush1.msra.mxu0 0.0
          %1340 = vmatprep.subr.mxu0 0.0
          %1341 = vmatpush1.msra.mxu0 %v1268
          %1342 = vmatprep.subr.mxu0 0.0
          %1343 = vmatpush1.msra.mxu0 %v1267
          %1344 = vmatprep.subr.mxu0 0.0
          %1345 = vmatpush1.msra.mxu0 %v1266
          %1346 = vmatprep.subr.mxu0 0.0
          %1347 = vmatpush1.msra.mxu0 %v1265
          %1348 = vmatprep.subr.mxu0 0.0
          %1349 = vmatpush2.msra.mxu0 0.0
          %1350 = vmatprep.subr.mxu0 0.0
          %1351 = vmatpush2.msra.mxu0 0.0
          %1352 = vmatprep.subr.mxu0 0.0
          %1353 = vmatpush2.msra.mxu0 0.0
          %1354 = vmatprep.subr.mxu0 0.0
          %1355 = vmatpush2.msra.mxu0 0.0
          %1356 = vmatprep.subr.mxu0 0.0
          %1357 = vmatpush2.msra.mxu0 0.0
          %1358 = vmatprep.subr.mxu0 0.0
          %1359 = vmatpush2.msra.mxu0 0.0
          %1360 = vmatprep.subr.mxu0 0.0
          %1361 = vmatpush2.msra.mxu0 0.0
          %1362 = vmatprep.subr.mxu0 0.0
          %1363 = vmatpush2.msra.mxu0 0.0
          %1364 = vmatprep.subr.mxu0 0.0
          %1365 = vmatpush2.msra.mxu0 0.0
          %1366 = vmatprep.subr.mxu0 0.0
          %1367 = vmatpush2.msra.mxu0 0.0
          %1368 = vmatprep.subr.mxu0 0.0
          %1369 = vmatpush2.msra.mxu0 0.0
          %1370 = vmatprep.subr.mxu0 0.0
          %1371 = vmatpush2.msra.mxu0 0.0
          %1372 = vmatprep.subr.mxu0 0.0
          %1373 = vmatpush2.msra.mxu0 0.0
          %1374 = vmatprep.subr.mxu0 0.0
          %1375 = vmatpush2.msra.mxu0 0.0
          %1376 = vmatprep.subr.mxu0 0.0
          %1377 = vmatpush2.msra.mxu0 0.0
          %1378 = vmatprep.subr.mxu0 0.0
          %1379 = vmatpush2.msra.mxu0 0.0
          %1380 = vmatprep.mubr.f32.mxu0 0.0
          %1381 = vmatmul.mubr.f32.gmra.mxu0 %v1278
          %v1382 = vpop.f32.mrf.mxu0
          %v1383 = vadd.f32 %v1274, %v1382
          %v1384 = vpop.f32.mrf.mxu0
          %1385 = vmatprep.mubr.f32.mxu0 0.0
          %1386 = vmatmul.mubr.f32.gmra.mxu0 %v1281
          %v1387 = vpop.f32.mrf.mxu0
          %v1388 = vadd.f32 %v1274, %v1387
          %v1389 = vpop.f32.mrf.mxu0
          %1390 = vmatprep.mubr.f32.mxu0 0.0
          %1391 = vmatmul.mubr.f32.gmra.mxu0 %v1284
          %v1392 = vpop.f32.mrf.mxu0
          %v1393 = vadd.f32 %v1274, %v1392
          %v1394 = vpop.f32.mrf.mxu0
          %1395 = vmatprep.mubr.f32.mxu0 0.0
          %1396 = vmatmul.mubr.f32.gmra.mxu0 %v1287
          %v1397 = vpop.f32.mrf.mxu0
          %v1398 = vadd.f32 %v1274, %v1397
          %v1399 = vpop.f32.mrf.mxu0
          %1400 = vmatprep.mubr.f32.mxu0 0.0
          %1401 = vmatmul.mubr.f32.gmra.mxu0 %v1290
          %v1402 = vpop.f32.mrf.mxu0
          %v1403 = vadd.f32 %v1274, %v1402
          %v1404 = vpop.f32.mrf.mxu0
          %1405 = vmatprep.mubr.f32.mxu0 0.0
          %1406 = vmatmul.mubr.f32.gmra.mxu0 %v1293
          %v1407 = vpop.f32.mrf.mxu0
          %v1408 = vadd.f32 %v1274, %v1407
          %v1409 = vpop.f32.mrf.mxu0
          %1410 = vmatprep.mubr.f32.mxu0 0.0
          %1411 = vmatmul.mubr.f32.gmra.mxu0 %v1296
          %v1412 = vpop.f32.mrf.mxu0
          %v1413 = vadd.f32 %v1274, %v1412
          %v1414 = vpop.f32.mrf.mxu0
          %1415 = vmatprep.mubr.f32.mxu0 0.0
          %1416 = vmatmul.mubr.f32.gmra.mxu0 %v1299
          %v1417 = vpop.f32.mrf.mxu0
          %v1418 = vadd.f32 %v1274, %v1417
          %v1419 = vpop.f32.mrf.mxu0
          %1420 = vmatprep.mubr.f32.mxu0 0.0
          %1421 = vmatmul.mubr.f32.gmra.mxu0 %v1302
          %v1422 = vpop.f32.mrf.mxu0
          %v1423 = vadd.f32 %v1274, %v1422
          %v1424 = vpop.f32.mrf.mxu0
          %1425 = vmatprep.mubr.f32.mxu0 0.0
          %1426 = vmatmul.mubr.f32.gmra.mxu0 %v1305
          %v1427 = vpop.f32.mrf.mxu0
          %v1428 = vadd.f32 %v1274, %v1427
          %v1429 = vpop.f32.mrf.mxu0
          %1430 = vmatprep.mubr.f32.mxu0 0.0
          %1431 = vmatmul.mubr.f32.gmra.mxu0 %v1308
          %v1432 = vpop.f32.mrf.mxu0
          %v1433 = vadd.f32 %v1274, %v1432
          %v1434 = vpop.f32.mrf.mxu0
          %1435 = vmatprep.mubr.f32.mxu0 0.0
          %1436 = vmatmul.mubr.f32.gmra.mxu0 %v1311
          %v1437 = vpop.f32.mrf.mxu0
          %v1438 = vadd.f32 %v1274, %v1437
          %v1439 = vpop.f32.mrf.mxu0
          %1440 = vmatprep.mubr.f32.mxu0 0.0
          %1441 = vmatmul.mubr.f32.gmra.mxu0 %v1314
          %v1442 = vpop.f32.mrf.mxu0
          %v1443 = vadd.f32 %v1274, %v1442
          %v1444 = vpop.f32.mrf.mxu0
          %1445 = vdwg.mxu0
          %vm1446 = vcmask 64512
          %v1447 = vsel %vm1446, %v1383, -inf
          %1448 = vmax.xlane.f32.xlu0 %v1447
          %v1449 = vpop.xlane.xlu0 %1448
          %v1450 = vsel %vm1446, %v1388, -inf
          %1451 = vmax.xlane.f32.xlu0 %v1450
          %v1452 = vpop.xlane.xlu0 %1451
          %v1453 = vsel %vm1446, %v1393, -inf
          %1454 = vmax.xlane.f32.xlu0 %v1453
          %v1455 = vpop.xlane.xlu0 %1454
          %v1456 = vsel %vm1446, %v1398, -inf
          %1457 = vmax.xlane.f32.xlu0 %v1456
          %v1458 = vpop.xlane.xlu0 %1457
          %v1459 = vsel %vm1446, %v1403, -inf
          %1460 = vmax.xlane.f32.xlu0 %v1459
          %v1461 = vpop.xlane.xlu0 %1460
          %v1462 = vsel %vm1446, %v1408, -inf
          %1463 = vmax.xlane.f32.xlu0 %v1462
          %v1464 = vpop.xlane.xlu0 %1463
          %v1465 = vsel %vm1446, %v1413, -inf
          %1466 = vmax.xlane.f32.xlu0 %v1465
          %v1467 = vpop.xlane.xlu0 %1466
          %v1468 = vsel %vm1446, %v1418, -inf
          %1469 = vmax.xlane.f32.xlu0 %v1468
          %v1470 = vpop.xlane.xlu0 %1469
          %v1471 = vsel %vm1446, %v1423, -inf
          %1472 = vmax.xlane.f32.xlu0 %v1471
          %v1473 = vpop.xlane.xlu0 %1472
          %v1474 = vsel %vm1446, %v1428, -inf
          %1475 = vmax.xlane.f32.xlu0 %v1474
          %v1476 = vpop.xlane.xlu0 %1475
          %v1477 = vsel %vm1446, %v1433, -inf
          %1478 = vmax.xlane.f32.xlu0 %v1477
          %v1479 = vpop.xlane.xlu0 %1478
          %v1480 = vsel %vm1446, %v1438, -inf
          %1481 = vmax.xlane.f32.xlu0 %v1480
          %v1482 = vpop.xlane.xlu0 %1481
          %v1483 = vsel %vm1446, %v1443, -inf
          %1484 = vmax.xlane.f32.xlu0 %v1483
          %v1485 = vpop.xlane.xlu0 %1484
          %v1486 = vsub.f32 %v1383, %v1449
          %v1487 = vsub.f32 %v1388, %v1452
          %v1488 = vsub.f32 %v1393, %v1455
          %v1489 = vsub.f32 %v1398, %v1458
          %v1490 = vsub.f32 %v1403, %v1461
          %v1491 = vsub.f32 %v1408, %v1464
          %v1492 = vsub.f32 %v1413, %v1467
          %v1493 = vsub.f32 %v1418, %v1470
          %v1494 = vsub.f32 %v1423, %v1473
          %v1495 = vsub.f32 %v1428, %v1476
          %v1496 = vsub.f32 %v1433, %v1479
          %v1497 = vsub.f32 %v1438, %v1482
          %v1498 = vsub.f32 %v1443, %v1485
          %v1499 = vmul.f32 %v1486, 1.442695
          %v1500 = vpow.pop %v1499
          %v1501 = vmul.f32 %v1487, 1.442695
          %v1502 = vpow.pop %v1501
          %v1503 = vmul.f32 %v1488, 1.442695
          %v1504 = vpow.pop %v1503
          %v1505 = vmul.f32 %v1489, 1.442695
          %v1506 = vpow.pop %v1505
          %v1507 = vmul.f32 %v1490, 1.442695
          %v1508 = vpow.pop %v1507
          %v1509 = vmul.f32 %v1491, 1.442695
          %v1510 = vpow.pop %v1509
          %v1511 = vmul.f32 %v1492, 1.442695
          %v1512 = vpow.pop %v1511
          %v1513 = vmul.f32 %v1493, 1.442695
          %v1514 = vpow.pop %v1513
          %v1515 = vmul.f32 %v1494, 1.442695
          %v1516 = vpow.pop %v1515
          %v1517 = vmul.f32 %v1495, 1.442695
          %v1518 = vpow.pop %v1517
          %v1519 = vmul.f32 %v1496, 1.442695
          %v1520 = vpow.pop %v1519
          %v1521 = vmul.f32 %v1497, 1.442695
          %v1522 = vpow.pop %v1521
          %v1523 = vmul.f32 %v1498, 1.442695
          %v1524 = vpow.pop %v1523
          %v1525 = vsel %vm1446, %v1500, 0.0
          %1526 = vadd.xlane.f32.xlu0 %v1525
          %v1527 = vpop.xlane.xlu0 %1526
          %v1528 = vsel %vm1446, %v1502, 0.0
          %1529 = vadd.xlane.f32.xlu0 %v1528
          %v1530 = vpop.xlane.xlu0 %1529
          %v1531 = vsel %vm1446, %v1504, 0.0
          %1532 = vadd.xlane.f32.xlu0 %v1531
          %v1533 = vpop.xlane.xlu0 %1532
          %v1534 = vsel %vm1446, %v1506, 0.0
          %1535 = vadd.xlane.f32.xlu0 %v1534
          %v1536 = vpop.xlane.xlu0 %1535
          %v1537 = vsel %vm1446, %v1508, 0.0
          %1538 = vadd.xlane.f32.xlu0 %v1537
          %v1539 = vpop.xlane.xlu0 %1538
          %v1540 = vsel %vm1446, %v1510, 0.0
          %1541 = vadd.xlane.f32.xlu0 %v1540
          %v1542 = vpop.xlane.xlu0 %1541
          %v1543 = vsel %vm1446, %v1512, 0.0
          %1544 = vadd.xlane.f32.xlu0 %v1543
          %v1545 = vpop.xlane.xlu0 %1544
          %v1546 = vsel %vm1446, %v1514, 0.0
          %1547 = vadd.xlane.f32.xlu0 %v1546
          %v1548 = vpop.xlane.xlu0 %1547
          %v1549 = vsel %vm1446, %v1516, 0.0
          %1550 = vadd.xlane.f32.xlu0 %v1549
          %v1551 = vpop.xlane.xlu0 %1550
          %v1552 = vsel %vm1446, %v1518, 0.0
          %1553 = vadd.xlane.f32.xlu0 %v1552
          %v1554 = vpop.xlane.xlu0 %1553
          %v1555 = vsel %vm1446, %v1520, 0.0
          %1556 = vadd.xlane.f32.xlu0 %v1555
          %v1557 = vpop.xlane.xlu0 %1556
          %v1558 = vsel %vm1446, %v1522, 0.0
          %1559 = vadd.xlane.f32.xlu0 %v1558
          %v1560 = vpop.xlane.xlu0 %1559
          %v1561 = vsel %vm1446, %v1524, 0.0
          %1562 = vadd.xlane.f32.xlu0 %v1561
          %v1563 = vpop.xlane.xlu0 %1562
          %v1564 = vlog2.pop %v1527
          %v1565 = vmul.f32 %v1564, 0.6931472
          %v1566 = vlog2.pop %v1530
          %v1567 = vmul.f32 %v1566, 0.6931472
          %v1568 = vlog2.pop %v1533
          %v1569 = vmul.f32 %v1568, 0.6931472
          %v1570 = vlog2.pop %v1536
          %v1571 = vmul.f32 %v1570, 0.6931472
          %v1572 = vlog2.pop %v1539
          %v1573 = vmul.f32 %v1572, 0.6931472
          %v1574 = vlog2.pop %v1542
          %v1575 = vmul.f32 %v1574, 0.6931472
          %v1576 = vlog2.pop %v1545
          %v1577 = vmul.f32 %v1576, 0.6931472
          %v1578 = vlog2.pop %v1548
          %v1579 = vmul.f32 %v1578, 0.6931472
          %v1580 = vlog2.pop %v1551
          %v1581 = vmul.f32 %v1580, 0.6931472
          %v1582 = vlog2.pop %v1554
          %v1583 = vmul.f32 %v1582, 0.6931472
          %v1584 = vlog2.pop %v1557
          %v1585 = vmul.f32 %v1584, 0.6931472
          %v1586 = vlog2.pop %v1560
          %v1587 = vmul.f32 %v1586, 0.6931472
          %v1588 = vlog2.pop %v1563
          %v1589 = vmul.f32 %v1588, 0.6931472
          %v1590 = vadd.f32 %v1449, %v1565
          %v1591 = vadd.f32 %v1452, %v1567
          %v1592 = vadd.f32 %v1455, %v1569
          %v1593 = vadd.f32 %v1458, %v1571
          %v1594 = vadd.f32 %v1461, %v1573
          %v1595 = vadd.f32 %v1464, %v1575
          %v1596 = vadd.f32 %v1467, %v1577
          %v1597 = vadd.f32 %v1470, %v1579
          %v1598 = vadd.f32 %v1473, %v1581
          %v1599 = vadd.f32 %v1476, %v1583
          %v1600 = vadd.f32 %v1479, %v1585
          %v1601 = vadd.f32 %v1482, %v1587
          %v1602 = vadd.f32 %v1485, %v1589
          %v1603 = vsub.f32 %v1383, %v1590
          %v1604 = vsub.f32 %v1388, %v1591
          %v1605 = vsub.f32 %v1393, %v1592
          %v1606 = vsub.f32 %v1398, %v1593
          %v1607 = vsub.f32 %v1403, %v1594
          %v1608 = vsub.f32 %v1408, %v1595
          %v1609 = vsub.f32 %v1413, %v1596
          %v1610 = vsub.f32 %v1418, %v1597
          %v1611 = vsub.f32 %v1423, %v1598
          %v1612 = vsub.f32 %v1428, %v1599
          %v1613 = vsub.f32 %v1433, %v1600
          %v1614 = vsub.f32 %v1438, %v1601
          %v1615 = vsub.f32 %v1443, %v1602
          %1616 = vst.msk [vmem:[%s431] sm:$0xff] %vm1446, %v1603
          %1617 = vst.msk [vmem:[%s431 + $0x8] sm:$0xff] %vm1446, %v1604
          %1618 = vst.msk [vmem:[%s431 + $0x10] sm:$0xff] %vm1446, %v1605
          %1619 = vst.msk [vmem:[%s431 + $0x18] sm:$0xff] %vm1446, %v1606
          %1620 = vst.msk [vmem:[%s431 + $0x20] sm:$0xff] %vm1446, %v1607
          %1621 = vst.msk [vmem:[%s431 + $0x28] sm:$0xff] %vm1446, %v1608
          %1622 = vst.msk [vmem:[%s431 + $0x30] sm:$0xff] %vm1446, %v1609
          %1623 = vst.msk [vmem:[%s431 + $0x38] sm:$0xff] %vm1446, %v1610
          %1624 = vst.msk [vmem:[%s431 + $0x40] sm:$0xff] %vm1446, %v1611
          %1625 = vst.msk [vmem:[%s431 + $0x48] sm:$0xff] %vm1446, %v1612
          %1626 = vst.msk [vmem:[%s431 + $0x50] sm:$0xff] %vm1446, %v1613
          %1627 = vst.msk [vmem:[%s431 + $0x58] sm:$0xff] %vm1446, %v1614
          %1628 = vst.msk [vmem:[%s431 + $0x60] sm:$0xff] %vm1446, %v1615
        $region97: #{tpu_custom_call.1} parent=84 // pred_fallthru
          _
        %s1629 = smul.u32 13, %s22
        %p1630 = scmp.lt.s32.totalorder %s1629, 25
        %s1631 = scalar_select %p1630, %s1629, 25
        %s1632 = smul.addr %s1631, 8
        %s1633 = scalar_lea.vmem %s7, %s1632
        // Predicated region
        $region98: #{tpu_custom_call.1} parent=84 // pred_check
          %p1634 = pneg %p212
        $region99: #{tpu_custom_call.1} parent=84 // pred_check_branch
          %1636 = sbr.rel (%p1634) target = $region101
        $region100: #{tpu_custom_call.1} parent=84 // pred_region
          %s1637 = smul.u32 13, %s22
        $region101: #{tpu_custom_call.1} parent=84 // pred_fallthru
          _
      $region85: #{tpu_custom_call.1} parent=5 // pred_fallthru
        _
      %p1638 = scmp.le.s32.totalorder 2, %s13
      // Predicated region
      $region102: #{tpu_custom_call.1} parent=5 // pred_check
        %p1639 = pneg %p1638
      $region103: #{tpu_custom_call.1} parent=5 // pred_check_branch
        %1641 = sbr.rel (%p1639) target = $region105
      $region104: #{tpu_custom_call.1} parent=5 // pred_region
        %s1642 = ssub.s32 %s13, 2
        // Predicated region
        $region106: #{tpu_custom_call.1} parent=104 // pred_check
          %p1643 = pneg %p218
        $region107: #{tpu_custom_call.1} parent=104 // pred_check_branch
          %1645 = sbr.rel (%p1643) target = $region109
        $region108: #{tpu_custom_call.1} parent=104 // pred_region
          %s1646 = smul.u32 13, %s24
          %p1647 = scmp.lt.s32.totalorder %s1646, 25
          %s1648 = scalar_select %p1647, %s1646, 25
          %s1649 = smul.addr %s1648, 8
          %s1650 = scalar_lea.vmem %s7, %s1649
        $region109: #{tpu_custom_call.1} parent=104 // pred_fallthru
          _
      $region105: #{tpu_custom_call.1} parent=5 // pred_fallthru
        _
    $region6: #{tpu_custom_call.1} parent=1 // loop_footer
      %s17 = sadd.s32 1, %s13
    $region7: #{tpu_custom_call.1} parent=1 // loop_footer_branch
      %12 = sbr.rel target = $region3
    $region8: #{tpu_custom_call.1} parent=1 // loop_exit
      _

</llo_original>
